<compile_context>
chip_gen: v6e
topology: v6e:2x2x1
jax: 0.10.0
libtpu: 0.0.40
codegen_flags: <defaults>
</compile_context>

<pallas_src>
import functools

import numpy as np

import jax
import jax.numpy as jnp
from jax import lax
from jax.experimental import pallas as pl
from jax.experimental.pallas import tpu as pltpu


_LANES = 128


def _round_up(x, m):
    return x + (-x) % m


def _pick_tiles(M, target):
    """Split M rows into nt equal sublane-aligned tiles of size tm.

    Chooses the tile count first so the pad is at most 7 rows per tile
    (instead of rounding M up to a multiple of `target`), and keeps >= 2
    'parallel' tiles for large M so both v7x TensorCores are used.
    """
    nt = max(1, pl.cdiv(M, target))
    if nt == 1 and M >= 256:
        nt = 2
    tm = _round_up(pl.cdiv(M, nt), 8)
    return nt, tm, nt * tm


# ---------------------------------------------------------------------------
# Pallas kernels
# ---------------------------------------------------------------------------
def _conv_relu_pool_kernel(x_ref, w_ref, b_ref, o_ref, *, tm):
    """Fused conv (im2col matmul) + 2x2 max-pool + bias + ReLU.

    x_ref : (4*tm, K)  the four pool-tap patch blocks stacked tap-major
    w_ref : (K, 128)   flattened conv weights, zero-padded to 128 lanes
    b_ref : (1, 128)   bias, zero-padded
    o_ref : (tm, 128)  pooled output rows (lane-dense store)

    ReLU is monotone and the bias is per-column, so
    relu(max_t(dot_t) + b) == maxpool(relu(conv + b)).
    """
    y = jnp.dot(x_ref[...], w_ref[...], preferred_element_type=jnp.float32)
    # Tap max via sublane-aligned static slices (tm % 8 == 0): pure VPU max.
    y = jnp.maximum(jnp.maximum(y[0 * tm:1 * tm], y[1 * tm:2 * tm]),
                    jnp.maximum(y[2 * tm:3 * tm], y[3 * tm:4 * tm]))
    o_ref[...] = jnp.maximum(y + b_ref[...], 0.0)


def _fc_head_kernel(x_ref, w1_ref, b1_ref, w2_ref, b2_ref, w3_ref, b3_ref, o_ref):
    """Fused fc1+ReLU -> fc2+ReLU -> fc3 -> log-softmax (all VMEM-resident)."""
    h = jnp.dot(x_ref[...], w1_ref[...], preferred_element_type=jnp.float32) + b1_ref[...]
    h = jnp.maximum(h, 0.0)
    h = jnp.dot(h, w2_ref[...], preferred_element_type=jnp.float32) + b2_ref[...]
    h = jnp.maximum(h, 0.0)
    z = jnp.dot(h, w3_ref[...], preferred_element_type=jnp.float32) + b3_ref[...]
    m = jnp.max(z, axis=-1, keepdims=True)
    lse = m + jnp.log(jnp.sum(jnp.exp(z - m), axis=-1, keepdims=True))
    o_ref[...] = z - lse


# ---------------------------------------------------------------------------
# Wrappers
# ---------------------------------------------------------------------------
def conv_relu_pool_pallas(x_nhwc, w_oihw, b, *, tile_m=256):
    """Fused (conv 5x5 valid) + ReLU + (2x2/2 max-pool).

    x_nhwc: (B, H, W, Cin) float32, w_oihw: (Cout, Cin, kh, kw) like torch.
    Returns (B, PH, PW, Cout) NHWC.
    """
    B, H, W, Cin = x_nhwc.shape
    Cout, _, kh, kw = w_oihw.shape
    OH, OW = H - kh + 1, W - kw + 1
    PH, PW = OH // 2, OW // 2
    K = kh * kw * Cin
    M = B * PH * PW
    Np = _LANES  # lane-dense output width (Cout <= 128)

    x_nhwc = x_nhwc.astype(jnp.float32)
    # OIHW -> (kh*kw*Cin, Cout) with (i, j, c) row order; zero-pad the output
    # channels to 128 so kernel stores are unmasked full-lane vst.
    wf = jnp.transpose(w_oihw, (2, 3, 1, 0)).reshape(K, Cout).astype(jnp.float32)
    wf = jnp.pad(wf, ((0, 0), (0, Np - Cout)))
    bf = jnp.pad(b.reshape(1, Cout).astype(jnp.float32), ((0, 0), (0, Np - Cout)))

    nt, tm, Mp = _pick_tiles(M, tile_m)

    def tap(dy, dx):
        # im2col patches of the conv outputs that feed pool tap (dy, dx):
        # row (b, ph, pw) -> conv output at (2*ph + dy, 2*pw + dx).
        cols = []
        for i in range(kh):
            for j in range(kw):
                cols.append(x_nhwc[:, dy + i:dy + i + 2 * PH:2,
                                      dx + j:dx + j + 2 * PW:2, :])
        return jnp.stack(cols, axis=3).reshape(M, K)   # (M, kh*kw*Cin)

    taps = jnp.stack([tap(0, 0), tap(0, 1), tap(1, 0), tap(1, 1)], axis=0)
    taps = jnp.pad(taps, ((0, 0), (0, Mp - M), (0, 0)))            # (4, Mp, K)
    # Pack tap-major within each M tile so one contiguous (4*tm, K) block
    # feeds a single matmul per grid step.
    taps = taps.reshape(4, nt, tm, K).transpose(1, 0, 2, 3).reshape(nt * 4 * tm, K)

    out = pl.pallas_call(
        functools.partial(_conv_relu_pool_kernel, tm=tm),
        out_shape=jax.ShapeDtypeStruct((Mp, Np), jnp.float32),
        grid=(nt,),
        in_specs=[pl.BlockSpec((4 * tm, K), lambda m: (m, 0)),
                  pl.BlockSpec((K, Np), lambda m: (0, 0)),    # weights resident
                  pl.BlockSpec((1, Np), lambda m: (0, 0))],   # bias resident
        out_specs=pl.BlockSpec((tm, Np), lambda m: (m, 0)),
        compiler_params=pltpu.CompilerParams(
            dimension_semantics=("parallel",)),
    )(taps, wf, bf)
    return out[:M, :Cout].reshape(B, PH, PW, Cout)


def fc_head_pallas(x, w1, b1, w2, b2, w3, b3, *, tile_b=256):
    """Fused 3-layer MLP head + log-softmax.  x: (B, 400) -> (B, 10)."""
    B, K = x.shape
    N1, N2, N3 = w1.shape[1], w2.shape[1], w3.shape[1]
    nb, tb, Bp = _pick_tiles(B, tile_b)
    xp = jnp.pad(x.astype(jnp.float32), ((0, Bp - B), (0, 0)))

    out = pl.pallas_call(
        _fc_head_kernel,
        out_shape=jax.ShapeDtypeStruct((Bp, N3), jnp.float32),
        grid=(nb,),
        in_specs=[pl.BlockSpec((tb, K), lambda i: (i, 0)),
                  pl.BlockSpec((K, N1), lambda i: (0, 0)),
                  pl.BlockSpec((1, N1), lambda i: (0, 0)),
                  pl.BlockSpec((N1, N2), lambda i: (0, 0)),
                  pl.BlockSpec((1, N2), lambda i: (0, 0)),
                  pl.BlockSpec((N2, N3), lambda i: (0, 0)),
                  pl.BlockSpec((1, N3), lambda i: (0, 0))],
        out_specs=pl.BlockSpec((tb, N3), lambda i: (i, 0)),
        compiler_params=pltpu.CompilerParams(
            dimension_semantics=("parallel",)),
    )(xp,
      w1.astype(jnp.float32), b1.reshape(1, -1).astype(jnp.float32),
      w2.astype(jnp.float32), b2.reshape(1, -1).astype(jnp.float32),
      w3.astype(jnp.float32), b3.reshape(1, -1).astype(jnp.float32))
    return out[:B]


# Row permutation mapping fc1 weights from torch's NCHW flatten order
# (x.view(-1, 400) of a (16,5,5) map) to the NHWC flatten order used on-device.
_FC1_NHWC_PERM = np.arange(400).reshape(16, 5, 5).transpose(1, 2, 0).reshape(400)


# ---------------------------------------------------------------------------
# Model
# ---------------------------------------------------------------------------
def init_params(key):
    ks = jax.random.split(key, 10)

    def u(k, shape, fan_in):
        bound = 1.0 / jnp.sqrt(float(fan_in))
        return jax.random.uniform(k, shape, jnp.float32, -bound, bound)

    return {
        "w1": u(ks[0], (6, 3, 5, 5), 3 * 25),     # OIHW, like torch Conv2d
        "b1": u(ks[1], (6,), 3 * 25),
        "w2": u(ks[2], (16, 6, 5, 5), 6 * 25),
        "b2": u(ks[3], (16,), 6 * 25),
        "wl1": u(ks[4], (400, 120), 400),         # stored as (in, out)
        "bl1": u(ks[5], (120,), 400),
        "wl2": u(ks[6], (120, 84), 120),
        "bl2": u(ks[7], (84,), 120),
        "wl3": u(ks[8], (84, 10), 84),
        "bl3": u(ks[9], (10,), 84),
    }


def forward(params, x):
    """x: (B, 3, 32, 32) NCHW float32 -> (B, 10) log-probs."""
    B = x.shape[0]
    xh = jnp.transpose(x, (0, 2, 3, 1)).astype(jnp.float32)       # NHWC

    # conv1 + relu + pool -> (B, 14, 14, 6); conv2 + relu + pool -> (B, 5, 5, 16)
    y = conv_relu_pool_pallas(xh, params["w1"], params["b1"])
    y = conv_relu_pool_pallas(y, params["w2"], params["b2"])

    # Flatten stays NHWC; fold the NCHW view(-1,400) ordering into fc1's rows.
    flat = y.reshape(B, 400)
    w1p = params["wl1"][_FC1_NHWC_PERM]

    return fc_head_pallas(flat, w1p, params["bl1"],
                          params["wl2"], params["bl2"],
                          params["wl3"], params["bl3"])


def reference(params, x):
    """Pure-JAX reference mirroring the PyTorch forward."""
    y = lax.conv_general_dilated(x, params["w1"], (1, 1), "VALID",
                                 dimension_numbers=("NCHW", "OIHW", "NCHW"))
    y = jnp.maximum(y + params["b1"][None, :, None, None], 0.0)
    y = lax.reduce_window(y, -jnp.inf, lax.max, (1, 1, 2, 2), (1, 1, 2, 2), "VALID")
    y = lax.conv_general_dilated(y, params["w2"], (1, 1), "VALID",
                                 dimension_numbers=("NCHW", "OIHW", "NCHW"))
    y = jnp.maximum(y + params["b2"][None, :, None, None], 0.0)
    y = lax.reduce_window(y, -jnp.inf, lax.max, (1, 1, 2, 2), (1, 1, 2, 2), "VALID")
    y = y.reshape(x.shape[0], 400)
    y = jnp.maximum(y @ params["wl1"] + params["bl1"], 0.0)
    y = jnp.maximum(y @ params["wl2"] + params["bl2"], 0.0)
    y = y @ params["wl3"] + params["bl3"]
    return jax.nn.log_softmax(y, axis=1)


if __name__ == "__main__":
    key = jax.random.PRNGKey(0)
    kx, kp = jax.random.split(key)
    # CIFAR-10 input: the .view(-1, 400) forces 32x32 spatial; small batch=2.
    x = jax.random.normal(kx, (2, 3, 32, 32), dtype=jnp.float32)
    params = init_params(kp)

    fwd = jax.jit(forward)
    out = jax.block_until_ready(fwd(params, x))
    ref = jax.block_until_ready(reference(params, x))

    assert out.shape == (2, 10), out.shape
    assert jnp.allclose(out, ref, rtol=1e-4, atol=1e-4), (
        f"max abs err {jnp.max(jnp.abs(out - ref))}")
    print("KERNEL_OK")
</pallas_src>

<mosaic_0001>
module attributes {stable_mosaic.version = 11 : i64} {
  func.func @_conv_relu_pool_kernel(%arg0: i32, %arg1: memref<800x75xf32, #tpu.memory_space<vmem>>, %arg2: memref<75x128xf32, #tpu.memory_space<vmem>>, %arg3: memref<1x128xf32, #tpu.memory_space<vmem>>, %arg4: memref<200x128xf32, #tpu.memory_space<vmem>>) attributes {dimension_semantics = [#tpu.dimension_semantics<parallel>], iteration_bounds = array<i64: 2>, scalar_prefetch = 0 : i64, scratch_operands = 0 : i64, tpu.core_type = #tpu.core_type<tc>, window_params = [{transform_indices = @transform_0, window_bounds = array<i64: 800, 75>}, {pipeline_mode = #tpu.pipeline_mode<synchronous>, transform_indices = @transform_1, window_bounds = array<i64: 75, 128>}, {pipeline_mode = #tpu.pipeline_mode<synchronous>, transform_indices = @transform_2, window_bounds = array<i64: 1, 128>}, {transform_indices = @transform_3, window_bounds = array<i64: 200, 128>}]} {
    %c0 = arith.constant 0 : index
    %c0_0 = arith.constant 0 : index
    %0 = vector.load %arg1[%c0, %c0_0] : memref<800x75xf32, #tpu.memory_space<vmem>>, vector<800x75xf32>
    %c0_1 = arith.constant 0 : index
    %c0_2 = arith.constant 0 : index
    %1 = vector.load %arg2[%c0_1, %c0_2] : memref<75x128xf32, #tpu.memory_space<vmem>>, vector<75x128xf32>
    %cst = arith.constant dense<0.000000e+00> : vector<800x128xf32>
    %2 = tpu.matmul %0, %1, %cst {dimension_numbers = #tpu.dot_dimension_numbers<[1], [0], [0], [1], [0, 0, 1, 1], [], []>} : vector<800x75xf32>, vector<75x128xf32>, vector<800x128xf32> -> vector<800x128xf32>
    %3 = vector.extract_strided_slice %2 {offsets = [0, 0], sizes = [200, 128], strides = [1, 1]} : vector<800x128xf32> to vector<200x128xf32>
    %4 = vector.extract_strided_slice %2 {offsets = [200, 0], sizes = [200, 128], strides = [1, 1]} : vector<800x128xf32> to vector<200x128xf32>
    %5 = arith.maximumf %3, %4 : vector<200x128xf32>
    %6 = vector.extract_strided_slice %2 {offsets = [400, 0], sizes = [200, 128], strides = [1, 1]} : vector<800x128xf32> to vector<200x128xf32>
    %7 = vector.extract_strided_slice %2 {offsets = [600, 0], sizes = [200, 128], strides = [1, 1]} : vector<800x128xf32> to vector<200x128xf32>
    %8 = arith.maximumf %6, %7 : vector<200x128xf32>
    %9 = arith.maximumf %5, %8 : vector<200x128xf32>
    %c0_3 = arith.constant 0 : index
    %c0_4 = arith.constant 0 : index
    %10 = vector.load %arg3[%c0_3, %c0_4] : memref<1x128xf32, #tpu.memory_space<vmem>>, vector<1x128xf32>
    %11 = vector.broadcast %10 : vector<1x128xf32> to vector<200x128xf32>
    %12 = arith.addf %9, %11 : vector<200x128xf32>
    %cst_5 = arith.constant 0.000000e+00 : f32
    %13 = vector.broadcast %cst_5 : f32 to vector<200x128xf32>
    %14 = arith.maximumf %12, %13 : vector<200x128xf32>
    %c0_6 = arith.constant 0 : index
    %c0_7 = arith.constant 0 : index
    %15 = vector.load %arg4[%c0_6, %c0_7] : memref<200x128xf32, #tpu.memory_space<vmem>>, vector<200x128xf32>
    tpu.vector_store %arg4[%c0_6, %c0_7], %14 {strides = array<i32>} : memref<200x128xf32, #tpu.memory_space<vmem>>, vector<200x128xf32>,
    return
  }
  func.func @transform_0(%arg0: i32) -> (i32, i32) {
    %c0_i32 = arith.constant 0 : i32
    %c0_i32_0 = arith.constant 0 : i32
    return %arg0, %c0_i32 : i32, i32
  }
  func.func @transform_1(%arg0: i32) -> (i32, i32) {
    %c0_i32 = arith.constant 0 : i32
    %c0_i32_0 = arith.constant 0 : i32
    %c0_i32_1 = arith.constant 0 : i32
    return %c0_i32, %c0_i32_0 : i32, i32
  }
  func.func @transform_2(%arg0: i32) -> (i32, i32) {
    %c0_i32 = arith.constant 0 : i32
    %c0_i32_0 = arith.constant 0 : i32
    %c0_i32_1 = arith.constant 0 : i32
    return %c0_i32, %c0_i32_0 : i32, i32
  }
  func.func @transform_3(%arg0: i32) -> (i32, i32) {
    %c0_i32 = arith.constant 0 : i32
    %c0_i32_0 = arith.constant 0 : i32
    return %arg0, %c0_i32 : i32, i32
  }
}

module attributes {stable_mosaic.version = 11 : i64} {
  func.func @_conv_relu_pool_kernel(%arg0: i32, %arg1: memref<224x150xf32, #tpu.memory_space<vmem>>, %arg2: memref<150x128xf32, #tpu.memory_space<vmem>>, %arg3: memref<1x128xf32, #tpu.memory_space<vmem>>, %arg4: memref<56x128xf32, #tpu.memory_space<vmem>>) attributes {dimension_semantics = [#tpu.dimension_semantics<parallel>], iteration_bounds = array<i64: 1>, scalar_prefetch = 0 : i64, scratch_operands = 0 : i64, tpu.core_type = #tpu.core_type<tc>, window_params = [{transform_indices = @transform_0, window_bounds = array<i64: 224, 150>}, {pipeline_mode = #tpu.pipeline_mode<synchronous>, transform_indices = @transform_1, window_bounds = array<i64: 150, 128>}, {pipeline_mode = #tpu.pipeline_mode<synchronous>, transform_indices = @transform_2, window_bounds = array<i64: 1, 128>}, {transform_indices = @transform_3, window_bounds = array<i64: 56, 128>}]} {
    %c0 = arith.constant 0 : index
    %c0_0 = arith.constant 0 : index
    %0 = vector.load %arg1[%c0, %c0_0] : memref<224x150xf32, #tpu.memory_space<vmem>>, vector<224x150xf32>
    %c0_1 = arith.constant 0 : index
    %c0_2 = arith.constant 0 : index
    %1 = vector.load %arg2[%c0_1, %c0_2] : memref<150x128xf32, #tpu.memory_space<vmem>>, vector<150x128xf32>
    %cst = arith.constant dense<0.000000e+00> : vector<224x128xf32>
    %2 = tpu.matmul %0, %1, %cst {dimension_numbers = #tpu.dot_dimension_numbers<[1], [0], [0], [1], [0, 0, 1, 1], [], []>} : vector<224x150xf32>, vector<150x128xf32>, vector<224x128xf32> -> vector<224x128xf32>
    %3 = vector.extract_strided_slice %2 {offsets = [0, 0], sizes = [56, 128], strides = [1, 1]} : vector<224x128xf32> to vector<56x128xf32>
    %4 = vector.extract_strided_slice %2 {offsets = [56, 0], sizes = [56, 128], strides = [1, 1]} : vector<224x128xf32> to vector<56x128xf32>
    %5 = arith.maximumf %3, %4 : vector<56x128xf32>
    %6 = vector.extract_strided_slice %2 {offsets = [112, 0], sizes = [56, 128], strides = [1, 1]} : vector<224x128xf32> to vector<56x128xf32>
    %7 = vector.extract_strided_slice %2 {offsets = [168, 0], sizes = [56, 128], strides = [1, 1]} : vector<224x128xf32> to vector<56x128xf32>
    %8 = arith.maximumf %6, %7 : vector<56x128xf32>
    %9 = arith.maximumf %5, %8 : vector<56x128xf32>
    %c0_3 = arith.constant 0 : index
    %c0_4 = arith.constant 0 : index
    %10 = vector.load %arg3[%c0_3, %c0_4] : memref<1x128xf32, #tpu.memory_space<vmem>>, vector<1x128xf32>
    %11 = vector.broadcast %10 : vector<1x128xf32> to vector<56x128xf32>
    %12 = arith.addf %9, %11 : vector<56x128xf32>
    %cst_5 = arith.constant 0.000000e+00 : f32
    %13 = vector.broadcast %cst_5 : f32 to vector<56x128xf32>
    %14 = arith.maximumf %12, %13 : vector<56x128xf32>
    %c0_6 = arith.constant 0 : index
    %c0_7 = arith.constant 0 : index
    %15 = vector.load %arg4[%c0_6, %c0_7] : memref<56x128xf32, #tpu.memory_space<vmem>>, vector<56x128xf32>
    tpu.vector_store %arg4[%c0_6, %c0_7], %14 {strides = array<i32>} : memref<56x128xf32, #tpu.memory_space<vmem>>, vector<56x128xf32>,
    return
  }
  func.func @transform_0(%arg0: i32) -> (i32, i32) {
    %c0_i32 = arith.constant 0 : i32
    %c0_i32_0 = arith.constant 0 : i32
    return %arg0, %c0_i32 : i32, i32
  }
  func.func @transform_1(%arg0: i32) -> (i32, i32) {
    %c0_i32 = arith.constant 0 : i32
    %c0_i32_0 = arith.constant 0 : i32
    %c0_i32_1 = arith.constant 0 : i32
    return %c0_i32, %c0_i32_0 : i32, i32
  }
  func.func @transform_2(%arg0: i32) -> (i32, i32) {
    %c0_i32 = arith.constant 0 : i32
    %c0_i32_0 = arith.constant 0 : i32
    %c0_i32_1 = arith.constant 0 : i32
    return %c0_i32, %c0_i32_0 : i32, i32
  }
  func.func @transform_3(%arg0: i32) -> (i32, i32) {
    %c0_i32 = arith.constant 0 : i32
    %c0_i32_0 = arith.constant 0 : i32
    return %arg0, %c0_i32 : i32, i32
  }
}

module attributes {stable_mosaic.version = 11 : i64} {
  func.func @_fc_head_kernel(%arg0: i32, %arg1: memref<8x400xf32, #tpu.memory_space<vmem>>, %arg2: memref<400x120xf32, #tpu.memory_space<vmem>>, %arg3: memref<1x120xf32, #tpu.memory_space<vmem>>, %arg4: memref<120x84xf32, #tpu.memory_space<vmem>>, %arg5: memref<1x84xf32, #tpu.memory_space<vmem>>, %arg6: memref<84x10xf32, #tpu.memory_space<vmem>>, %arg7: memref<1x10xf32, #tpu.memory_space<vmem>>, %arg8: memref<8x10xf32, #tpu.memory_space<vmem>>) attributes {dimension_semantics = [#tpu.dimension_semantics<parallel>], iteration_bounds = array<i64: 1>, scalar_prefetch = 0 : i64, scratch_operands = 0 : i64, tpu.core_type = #tpu.core_type<tc>, window_params = [{transform_indices = @transform_0, window_bounds = array<i64: 8, 400>}, {pipeline_mode = #tpu.pipeline_mode<synchronous>, transform_indices = @transform_1, window_bounds = array<i64: 400, 120>}, {pipeline_mode = #tpu.pipeline_mode<synchronous>, transform_indices = @transform_2, window_bounds = array<i64: 1, 120>}, {pipeline_mode = #tpu.pipeline_mode<synchronous>, transform_indices = @transform_3, window_bounds = array<i64: 120, 84>}, {pipeline_mode = #tpu.pipeline_mode<synchronous>, transform_indices = @transform_4, window_bounds = array<i64: 1, 84>}, {pipeline_mode = #tpu.pipeline_mode<synchronous>, transform_indices = @transform_5, window_bounds = array<i64: 84, 10>}, {pipeline_mode = #tpu.pipeline_mode<synchronous>, transform_indices = @transform_6, window_bounds = array<i64: 1, 10>}, {transform_indices = @transform_7, window_bounds = array<i64: 8, 10>}]} {
    %c0 = arith.constant 0 : index
    %c0_0 = arith.constant 0 : index
    %0 = vector.load %arg1[%c0, %c0_0] : memref<8x400xf32, #tpu.memory_space<vmem>>, vector<8x400xf32>
    %c0_1 = arith.constant 0 : index
    %c0_2 = arith.constant 0 : index
    %1 = vector.load %arg2[%c0_1, %c0_2] : memref<400x120xf32, #tpu.memory_space<vmem>>, vector<400x120xf32>
    %cst = arith.constant dense<0.000000e+00> : vector<8x120xf32>
    %2 = tpu.matmul %0, %1, %cst {dimension_numbers = #tpu.dot_dimension_numbers<[1], [0], [0], [1], [0, 0, 1, 1], [], []>} : vector<8x400xf32>, vector<400x120xf32>, vector<8x120xf32> -> vector<8x120xf32>
    %c0_3 = arith.constant 0 : index
    %c0_4 = arith.constant 0 : index
    %3 = vector.load %arg3[%c0_3, %c0_4] : memref<1x120xf32, #tpu.memory_space<vmem>>, vector<1x120xf32>
    %4 = vector.broadcast %3 : vector<1x120xf32> to vector<8x120xf32>
    %5 = arith.addf %2, %4 : vector<8x120xf32>
    %cst_5 = arith.constant 0.000000e+00 : f32
    %6 = vector.broadcast %cst_5 : f32 to vector<8x120xf32>
    %7 = arith.maximumf %5, %6 : vector<8x120xf32>
    %c0_6 = arith.constant 0 : index
    %c0_7 = arith.constant 0 : index
    %8 = vector.load %arg4[%c0_6, %c0_7] : memref<120x84xf32, #tpu.memory_space<vmem>>, vector<120x84xf32>
    %cst_8 = arith.constant dense<0.000000e+00> : vector<8x84xf32>
    %9 = tpu.matmul %7, %8, %cst_8 {dimension_numbers = #tpu.dot_dimension_numbers<[1], [0], [0], [1], [0, 0, 1, 1], [], []>} : vector<8x120xf32>, vector<120x84xf32>, vector<8x84xf32> -> vector<8x84xf32>
    %c0_9 = arith.constant 0 : index
    %c0_10 = arith.constant 0 : index
    %10 = vector.load %arg5[%c0_9, %c0_10] : memref<1x84xf32, #tpu.memory_space<vmem>>, vector<1x84xf32>
    %11 = vector.broadcast %10 : vector<1x84xf32> to vector<8x84xf32>
    %12 = arith.addf %9, %11 : vector<8x84xf32>
    %cst_11 = arith.constant 0.000000e+00 : f32
    %13 = vector.broadcast %cst_11 : f32 to vector<8x84xf32>
    %14 = arith.maximumf %12, %13 : vector<8x84xf32>
    %c0_12 = arith.constant 0 : index
    %c0_13 = arith.constant 0 : index
    %15 = vector.load %arg6[%c0_12, %c0_13] : memref<84x10xf32, #tpu.memory_space<vmem>>, vector<84x10xf32>
    %cst_14 = arith.constant dense<0.000000e+00> : vector<8x10xf32>
    %16 = tpu.matmul %14, %15, %cst_14 {dimension_numbers = #tpu.dot_dimension_numbers<[1], [0], [0], [1], [0, 0, 1, 1], [], []>} : vector<8x84xf32>, vector<84x10xf32>, vector<8x10xf32> -> vector<8x10xf32>
    %c0_15 = arith.constant 0 : index
    %c0_16 = arith.constant 0 : index
    %17 = vector.load %arg7[%c0_15, %c0_16] : memref<1x10xf32, #tpu.memory_space<vmem>>, vector<1x10xf32>
    %18 = vector.broadcast %17 : vector<1x10xf32> to vector<8x10xf32>
    %19 = arith.addf %16, %18 : vector<8x10xf32>
    %cst_17 = arith.constant dense<0xFF800000> : vector<8xf32>
    %20 = vector.multi_reduction <maximumf>, %19, %cst_17 [1] : vector<8x10xf32> to vector<8xf32>
    %21 = vector.shape_cast %20 : vector<8xf32> to vector<8x1xf32>
    %22 = vector.broadcast %21 : vector<8x1xf32> to vector<8x10xf32>
    %23 = arith.subf %19, %22 : vector<8x10xf32>
    %24 = math.exp %23 : vector<8x10xf32>
    %cst_18 = arith.constant dense<0.000000e+00> : vector<8xf32>
    %25 = vector.multi_reduction <add>, %24, %cst_18 [1] : vector<8x10xf32> to vector<8xf32>
    %26 = vector.shape_cast %25 : vector<8xf32> to vector<8x1xf32>
    %27 = math.log %26 : vector<8x1xf32>
    %28 = arith.addf %21, %27 : vector<8x1xf32>
    %29 = vector.broadcast %28 : vector<8x1xf32> to vector<8x10xf32>
    %30 = arith.subf %19, %29 : vector<8x10xf32>
    %c0_19 = arith.constant 0 : index
    %c0_20 = arith.constant 0 : index
    %31 = vector.load %arg8[%c0_19, %c0_20] : memref<8x10xf32, #tpu.memory_space<vmem>>, vector<8x10xf32>
    tpu.vector_store %arg8[%c0_19, %c0_20], %30 {strides = array<i32>} : memref<8x10xf32, #tpu.memory_space<vmem>>, vector<8x10xf32>,
    return
  }
  func.func @transform_0(%arg0: i32) -> (i32, i32) {
    %c0_i32 = arith.constant 0 : i32
    %c0_i32_0 = arith.constant 0 : i32
    return %arg0, %c0_i32 : i32, i32
  }
  func.func @transform_1(%arg0: i32) -> (i32, i32) {
    %c0_i32 = arith.constant 0 : i32
    %c0_i32_0 = arith.constant 0 : i32
    %c0_i32_1 = arith.constant 0 : i32
    return %c0_i32, %c0_i32_0 : i32, i32
  }
  func.func @transform_2(%arg0: i32) -> (i32, i32) {
    %c0_i32 = arith.constant 0 : i32
    %c0_i32_0 = arith.constant 0 : i32
    %c0_i32_1 = arith.constant 0 : i32
    return %c0_i32, %c0_i32_0 : i32, i32
  }
  func.func @transform_3(%arg0: i32) -> (i32, i32) {
    %c0_i32 = arith.constant 0 : i32
    %c0_i32_0 = arith.constant 0 : i32
    %c0_i32_1 = arith.constant 0 : i32
    return %c0_i32, %c0_i32_0 : i32, i32
  }
  func.func @transform_4(%arg0: i32) -> (i32, i32) {
    %c0_i32 = arith.constant 0 : i32
    %c0_i32_0 = arith.constant 0 : i32
    %c0_i32_1 = arith.constant 0 : i32
    return %c0_i32, %c0_i32_0 : i32, i32
  }
  func.func @transform_5(%arg0: i32) -> (i32, i32) {
    %c0_i32 = arith.constant 0 : i32
    %c0_i32_0 = arith.constant 0 : i32
    %c0_i32_1 = arith.constant 0 : i32
    return %c0_i32, %c0_i32_0 : i32, i32
  }
  func.func @transform_6(%arg0: i32) -> (i32, i32) {
    %c0_i32 = arith.constant 0 : i32
    %c0_i32_0 = arith.constant 0 : i32
    %c0_i32_1 = arith.constant 0 : i32
    return %c0_i32, %c0_i32_0 : i32, i32
  }
  func.func @transform_7(%arg0: i32) -> (i32, i32) {
    %c0_i32 = arith.constant 0 : i32
    %c0_i32_0 = arith.constant 0 : i32
    return %arg0, %c0_i32 : i32, i32
  }
}

</mosaic_0001>

<llo_original>
// kernel: forward.3
$region0: #{forward.3}
  #allocation0 [shape = 'u32[]', space=smem, size = 0x4, offset = 0x4, fixed_abs, tag = 'smem constant byte address 0x4 - core index']
  #allocation1 [shape = 'u32[144,128]{1,0:T(1,128)}', space=vmem, size = 0x12000, scoped, tag = 'internal scratch']
  %s0 = inlined_call_operand.vmem [shape: f32[1600,75], index: 0, kind: input, shape index: {}]
  %s1 = inlined_call_operand.vmem [shape: f32[75,128], index: 1, kind: input, shape index: {}]
  %s2 = inlined_call_operand.vmem [shape: f32[1,128], index: 2, kind: input, shape index: {}]
  %s3 = inlined_call_operand.vmem [shape: f32[400,128], index: 3, kind: output, shape index: {}]
  %s4 = sld [smem:[#allocation0]]
  $region45: #{forward.3} parent=0
    _
  %s6 = ssub.s32 1, %s4
  %s7 = scalar_select 0, %s6, %s4
  loop: start=0, step=1, limit=4
  $region2: #{forward.3} parent=0 // loop_pre_header
    _
  $region3: #{forward.3} parent=0 // loop_header
    %s9 = sphi 0, %s13
    %p10 = scmp.ge.s32.totalorder %s9, 4
    %s19 = sphi 0, %s21
    %s22 = sphi 0, %s19
    %s23 = sphi 0, %s22
    %s39 = sphi 0, %s23
    %s43 = sphi 0, %s43
    %s45 = sphi 0, %s43
    %s46 = sphi 0, %s45
    %s60 = sphi 0, %s46
    %s64 = sphi 0, %s64
    %s66 = sphi 0, %s64
    %s67 = sphi 0, %s66
    %s81 = sphi 0, %s67
    %s87 = sphi 0, %s89
    %s90 = sphi 0, %s87
    %s91 = sphi 0, %s90
    %s107 = sphi 0, %s91
  $region4: #{forward.3} parent=0 // loop_header_branch
    %12 = sbr.rel (%p10) target = $region8
  $region5: #{forward.3} parent=0 // loop_body
    %s14 = ssub.s32 %s9, 1
    %s15 = ssub.s32 %s9, 2
    %s16 = sadd.s32 %s9, 1
    %s17 = ssub.s32 %s9, %s16
    %p18 = scmp.eq.s32.totalorder %s17, 0
    %s20 = sadd.s32 %s19, 1
    %s21 = scalar_select %p18, %s19, %s20
    %p24 = pneg %p18
    %p25 = scmp.eq.s32.totalorder %s9, 1
    %p26 = por %p24, %p25
    %p27 = scmp.ne.s32.totalorder %s19, %s22
    %p28 = scmp.eq.s32.totalorder %s9, 0
    %p29 = por %p27, %p28
    %p30 = scmp.ne.s32.totalorder %s19, %s22
    %p31 = scmp.eq.s32.totalorder %s14, 1
    %p32 = por %p30, %p31
    %p33 = scmp.ne.s32.totalorder %s22, %s23
    %p34 = scmp.eq.s32.totalorder %s14, 0
    %p35 = por %p33, %p34
    %p36 = scmp.ne.s32.totalorder %s22, %s23
    %p37 = scmp.eq.s32.totalorder %s15, 1
    %p38 = por %p36, %p37
    %p40 = scmp.ne.s32.totalorder %s23, %s39
    %p41 = scmp.eq.s32.totalorder %s15, 0
    %p42 = por %p40, %p41
    %s44 = sadd.s32 %s43, 1
    %p47 = scmp.eq.s32.totalorder %s9, 1
    %p48 = scmp.ne.s32.totalorder %s43, %s45
    %p49 = scmp.eq.s32.totalorder %s9, 0
    %p50 = por %p48, %p49
    %p51 = scmp.ne.s32.totalorder %s43, %s45
    %p52 = scmp.eq.s32.totalorder %s14, 1
    %p53 = por %p51, %p52
    %p54 = scmp.ne.s32.totalorder %s45, %s46
    %p55 = scmp.eq.s32.totalorder %s14, 0
    %p56 = por %p54, %p55
    %p57 = scmp.ne.s32.totalorder %s45, %s46
    %p58 = scmp.eq.s32.totalorder %s15, 1
    %p59 = por %p57, %p58
    %p61 = scmp.ne.s32.totalorder %s46, %s60
    %p62 = scmp.eq.s32.totalorder %s15, 0
    %p63 = por %p61, %p62
    %s65 = sadd.s32 %s64, 1
    %p68 = scmp.eq.s32.totalorder %s9, 1
    %p69 = scmp.ne.s32.totalorder %s64, %s66
    %p70 = scmp.eq.s32.totalorder %s9, 0
    %p71 = por %p69, %p70
    %p72 = scmp.ne.s32.totalorder %s64, %s66
    %p73 = scmp.eq.s32.totalorder %s14, 1
    %p74 = por %p72, %p73
    %p75 = scmp.ne.s32.totalorder %s66, %s67
    %p76 = scmp.eq.s32.totalorder %s14, 0
    %p77 = por %p75, %p76
    %p78 = scmp.ne.s32.totalorder %s66, %s67
    %p79 = scmp.eq.s32.totalorder %s15, 1
    %p80 = por %p78, %p79
    %p82 = scmp.ne.s32.totalorder %s67, %s81
    %p83 = scmp.eq.s32.totalorder %s15, 0
    %p84 = por %p82, %p83
    %s85 = ssub.s32 %s9, %s16
    %p86 = scmp.eq.s32.totalorder %s85, 0
    %s88 = sadd.s32 %s87, 1
    %s89 = scalar_select %p86, %s87, %s88
    %p92 = pneg %p86
    %p93 = scmp.eq.s32.totalorder %s9, 1
    %p94 = por %p92, %p93
    %p95 = scmp.ne.s32.totalorder %s87, %s90
    %p96 = scmp.eq.s32.totalorder %s9, 0
    %p97 = por %p95, %p96
    %p98 = scmp.ne.s32.totalorder %s87, %s90
    %p99 = scmp.eq.s32.totalorder %s14, 1
    %p100 = por %p98, %p99
    %p101 = scmp.ne.s32.totalorder %s90, %s91
    %p102 = scmp.eq.s32.totalorder %s14, 0
    %p103 = por %p101, %p102
    %p104 = scmp.ne.s32.totalorder %s90, %s91
    %p105 = scmp.eq.s32.totalorder %s15, 1
    %p106 = por %p104, %p105
    %p108 = scmp.ne.s32.totalorder %s91, %s107
    %p109 = scmp.eq.s32.totalorder %s15, 0
    %p110 = por %p108, %p109
    %p111 = scmp.le.s32.totalorder 1, %s9
    %p112 = scmp.lt.s32.totalorder %s9, 3
    %p113 = pnand %p111, %p112
    %p114 = pneg %p113
    // Predicated region
    $region9: #{forward.3} parent=5 // pred_check
      _
    $region10: #{forward.3} parent=5 // pred_check_branch
      %116 = sbr.rel (%p113) target = $region12
    $region11: #{forward.3} parent=5 // pred_region
      %s117 = ssub.s32 %s9, 1
      // Predicated region
      $region13: #{forward.3} parent=11 // pred_check
        %p118 = pneg %p56
      $region14: #{forward.3} parent=11 // pred_check_branch
        %120 = sbr.rel (%p118) target = $region16
      $region15: #{forward.3} parent=11 // pred_region
        _
      $region16: #{forward.3} parent=11 // pred_fallthru
        _
      // Predicated region
      $region17: #{forward.3} parent=11 // pred_check
        %p121 = pneg %p77
      $region18: #{forward.3} parent=11 // pred_check_branch
        %123 = sbr.rel (%p121) target = $region20
      $region19: #{forward.3} parent=11 // pred_region
        _
      $region20: #{forward.3} parent=11 // pred_fallthru
        _
    $region12: #{forward.3} parent=5 // pred_fallthru
      _
    %p124 = scmp.lt.s32.totalorder %s9, 2
    // Predicated region
    $region21: #{forward.3} parent=5 // pred_check
      %p125 = pneg %p124
    $region22: #{forward.3} parent=5 // pred_check_branch
      %127 = sbr.rel (%p125) target = $region24
    $region23: #{forward.3} parent=5 // pred_region
      // Predicated region
      $region25: #{forward.3} parent=23 // pred_check
        %p128 = pneg %p29
      $region26: #{forward.3} parent=23 // pred_check_branch
        %130 = sbr.rel (%p128) target = $region28
      $region27: #{forward.3} parent=23 // pred_region
        %s131 = smul.u32 100, %s9
        %p132 = scmp.lt.s32.totalorder %s131, 199
        %s133 = scalar_select %p132, %s131, 199
        %s134 = smul.addr %s133, 8
        %s135 = scalar_lea.vmem %s0, %s134
        %s136 = smul.u32 100, %s9
      $region28: #{forward.3} parent=23 // pred_fallthru
        _
    $region24: #{forward.3} parent=5 // pred_fallthru
      _
    %p137 = scmp.le.s32.totalorder 1, %s9
    %p138 = scmp.lt.s32.totalorder %s9, 3
    %p139 = pnand %p137, %p138
    %p140 = pneg %p139
    // Predicated region
    $region29: #{forward.3} parent=5 // pred_check
      _
    $region30: #{forward.3} parent=5 // pred_check_branch
      %142 = sbr.rel (%p139) target = $region32
    $region31: #{forward.3} parent=5 // pred_region
      %s143 = ssub.s32 %s9, 1
      %s144 = smul.u32 100, %s14
      %p145 = scmp.lt.s32.totalorder %s144, 199
      %s146 = scalar_select %p145, %s144, 199
      %s147 = smul.addr %s146, 8
      %s148 = scalar_lea.vmem %s0, %s147
      %p149 = pneg %p35
      %p150 = pneg %p32
      %p151 = pneg %p56
      %p152 = pneg %p53
      %p153 = pneg %p77
      %p154 = pneg %p74
      %p155 = pneg %p103
      %p156 = pneg %p100
      %s157 = smul.u32 25, %s14
      %p158 = scmp.lt.s32.totalorder %s157, 49
      %s159 = scalar_select %p158, %s157, 49
      %s160 = smul.addr %s159, 8
      %s161 = scalar_lea.vmem %s3, %s160
      %s162 = smul.u32 100, %s14
      %p163 = scmp.lt.s32.totalorder %s162, 199
      %s164 = scalar_select %p163, %s162, 199
      %s165 = smul.addr %s164, 8
      %s166 = scalar_lea.vmem %s0, %s165
      %s167 = smul.u32 100, %s14
      %s168 = smul.u32 25, %s14
      %p169 = scmp.lt.s32.totalorder %s168, 49
      %s170 = scalar_select %p169, %s168, 49
      %s171 = smul.addr %s170, 8
      %s172 = scalar_lea.vmem %s3, %s171
      %s173 = smul.u32 25, %s14
      %v174 = vld [vmem:[%s166] sm:$0xff]
      %v175 = vld [vmem:[%s166 + $0x8] sm:$0xff]
      %v176 = vld [vmem:[%s166 + $0x10] sm:$0xff]
      %v177 = vld [vmem:[%s166 + $0x18] sm:$0xff]
      %v178 = vld [vmem:[%s166 + $0x20] sm:$0xff]
      %v179 = vld [vmem:[%s166 + $0x28] sm:$0xff]
      %v180 = vld [vmem:[%s166 + $0x30] sm:$0xff]
      %v181 = vld [vmem:[%s166 + $0x38] sm:$0xff]
      %v182 = vld [vmem:[%s166 + $0x40] sm:$0xff]
      %v183 = vld [vmem:[%s166 + $0x48] sm:$0xff]
      %v184 = vld [vmem:[%s166 + $0x50] sm:$0xff]
      %v185 = vld [vmem:[%s166 + $0x58] sm:$0xff]
      %v186 = vld [vmem:[%s166 + $0x60] sm:$0xff]
      %v187 = vld [vmem:[%s166 + $0x68] sm:$0xff]
      %v188 = vld [vmem:[%s166 + $0x70] sm:$0xff]
      %v189 = vld [vmem:[%s166 + $0x78] sm:$0xff]
      %v190 = vld [vmem:[%s166 + $0x80] sm:$0xff]
      %v191 = vld [vmem:[%s166 + $0x88] sm:$0xff]
      %v192 = vld [vmem:[%s166 + $0x90] sm:$0xff]
      %v193 = vld [vmem:[%s166 + $0x98] sm:$0xff]
      %v194 = vld [vmem:[%s166 + $0xa0] sm:$0xff]
      %v195 = vld [vmem:[%s166 + $0xa8] sm:$0xff]
      %v196 = vld [vmem:[%s166 + $0xb0] sm:$0xff]
      %v197 = vld [vmem:[%s166 + $0xb8] sm:$0xff]
      %v198 = vld [vmem:[%s166 + $0xc0] sm:$0xff]
      %v199 = vld [vmem:[%s166 + $0xc8] sm:$0xff]
      %v200 = vld [vmem:[%s166 + $0xd0] sm:$0xff]
      %v201 = vld [vmem:[%s166 + $0xd8] sm:$0xff]
      %v202 = vld [vmem:[%s166 + $0xe0] sm:$0xff]
      %v203 = vld [vmem:[%s166 + $0xe8] sm:$0xff]
      %v204 = vld [vmem:[%s166 + $0xf0] sm:$0xff]
      %v205 = vld [vmem:[%s166 + $0xf8] sm:$0xff]
      %v206 = vld [vmem:[%s166 + $0x100] sm:$0xff]
      %v207 = vld [vmem:[%s166 + $0x108] sm:$0xff]
      %v208 = vld [vmem:[%s166 + $0x110] sm:$0xff]
      %v209 = vld [vmem:[%s166 + $0x118] sm:$0xff]
      %v210 = vld [vmem:[%s166 + $0x120] sm:$0xff]
      %v211 = vld [vmem:[%s166 + $0x128] sm:$0xff]
      %v212 = vld [vmem:[%s166 + $0x130] sm:$0xff]
      %v213 = vld [vmem:[%s166 + $0x138] sm:$0xff]
      %v214 = vld [vmem:[%s166 + $0x140] sm:$0xff]
      %v215 = vld [vmem:[%s166 + $0x148] sm:$0xff]
      %v216 = vld [vmem:[%s166 + $0x150] sm:$0xff]
      %v217 = vld [vmem:[%s166 + $0x158] sm:$0xff]
      %v218 = vld [vmem:[%s166 + $0x160] sm:$0xff]
      %v219 = vld [vmem:[%s166 + $0x168] sm:$0xff]
      %v220 = vld [vmem:[%s166 + $0x170] sm:$0xff]
      %v221 = vld [vmem:[%s166 + $0x178] sm:$0xff]
      %v222 = vld [vmem:[%s166 + $0x180] sm:$0xff]
      %v223 = vld [vmem:[%s166 + $0x188] sm:$0xff]
      %v224 = vld [vmem:[%s166 + $0x190] sm:$0xff]
      %v225 = vld [vmem:[%s166 + $0x198] sm:$0xff]
      %v226 = vld [vmem:[%s166 + $0x1a0] sm:$0xff]
      %v227 = vld [vmem:[%s166 + $0x1a8] sm:$0xff]
      %v228 = vld [vmem:[%s166 + $0x1b0] sm:$0xff]
      %v229 = vld [vmem:[%s166 + $0x1b8] sm:$0xff]
      %v230 = vld [vmem:[%s166 + $0x1c0] sm:$0xff]
      %v231 = vld [vmem:[%s166 + $0x1c8] sm:$0xff]
      %v232 = vld [vmem:[%s166 + $0x1d0] sm:$0xff]
      %v233 = vld [vmem:[%s166 + $0x1d8] sm:$0xff]
      %v234 = vld [vmem:[%s166 + $0x1e0] sm:$0xff]
      %v235 = vld [vmem:[%s166 + $0x1e8] sm:$0xff]
      %v236 = vld [vmem:[%s166 + $0x1f0] sm:$0xff]
      %v237 = vld [vmem:[%s166 + $0x1f8] sm:$0xff]
      %v238 = vld [vmem:[%s166 + $0x200] sm:$0xff]
      %v239 = vld [vmem:[%s166 + $0x208] sm:$0xff]
      %v240 = vld [vmem:[%s166 + $0x210] sm:$0xff]
      %v241 = vld [vmem:[%s166 + $0x218] sm:$0xff]
      %v242 = vld [vmem:[%s166 + $0x220] sm:$0xff]
      %v243 = vld [vmem:[%s166 + $0x228] sm:$0xff]
      %v244 = vld [vmem:[%s166 + $0x230] sm:$0xff]
      %v245 = vld [vmem:[%s166 + $0x238] sm:$0xff]
      %v246 = vld [vmem:[%s166 + $0x240] sm:$0xff]
      %v247 = vld [vmem:[%s166 + $0x248] sm:$0xff]
      %v248 = vld [vmem:[%s166 + $0x250] sm:$0xff]
      %v249 = vld [vmem:[%s166 + $0x258] sm:$0xff]
      %v250 = vld [vmem:[%s166 + $0x260] sm:$0xff]
      %v251 = vld [vmem:[%s166 + $0x268] sm:$0xff]
      %v252 = vld [vmem:[%s166 + $0x270] sm:$0xff]
      %v253 = vld [vmem:[%s166 + $0x278] sm:$0xff]
      %v254 = vld [vmem:[%s166 + $0x280] sm:$0xff]
      %v255 = vld [vmem:[%s166 + $0x288] sm:$0xff]
      %v256 = vld [vmem:[%s166 + $0x290] sm:$0xff]
      %v257 = vld [vmem:[%s166 + $0x298] sm:$0xff]
      %v258 = vld [vmem:[%s166 + $0x2a0] sm:$0xff]
      %v259 = vld [vmem:[%s166 + $0x2a8] sm:$0xff]
      %v260 = vld [vmem:[%s166 + $0x2b0] sm:$0xff]
      %v261 = vld [vmem:[%s166 + $0x2b8] sm:$0xff]
      %v262 = vld [vmem:[%s166 + $0x2c0] sm:$0xff]
      %v263 = vld [vmem:[%s166 + $0x2c8] sm:$0xff]
      %v264 = vld [vmem:[%s166 + $0x2d0] sm:$0xff]
      %v265 = vld [vmem:[%s166 + $0x2d8] sm:$0xff]
      %v266 = vld [vmem:[%s166 + $0x2e0] sm:$0xff]
      %v267 = vld [vmem:[%s166 + $0x2e8] sm:$0xff]
      %v268 = vld [vmem:[%s166 + $0x2f0] sm:$0xff]
      %v269 = vld [vmem:[%s166 + $0x2f8] sm:$0xff]
      %v270 = vld [vmem:[%s166 + $0x300] sm:$0xff]
      %v271 = vld [vmem:[%s166 + $0x308] sm:$0xff]
      %v272 = vld [vmem:[%s166 + $0x310] sm:$0xff]
      %v273 = vld [vmem:[%s166 + $0x318] sm:$0xff]
      %v274 = vld [vmem:[%s1] sm:$0xff]
      %v275 = vld [vmem:[%s1 + $0x8] sm:$0xff]
      %v276 = vld [vmem:[%s1 + $0x10] sm:$0xff]
      %v277 = vld [vmem:[%s1 + $0x18] sm:$0xff]
      %v278 = vld [vmem:[%s1 + $0x20] sm:$0xff]
      %v279 = vld [vmem:[%s1 + $0x28] sm:$0xff]
      %v280 = vld [vmem:[%s1 + $0x30] sm:$0xff]
      %v281 = vld [vmem:[%s1 + $0x38] sm:$0xff]
      %v282 = vld [vmem:[%s1 + $0x40] sm:$0xff]
      %v283 = vld [vmem:[%s1 + $0x48] sm:$0x7]
      %vm284 = vcmask 613376
      %v286 = vsel %vm284, %v174, 0
      %v289 = vsel %vm284, %v175, 0
      %v292 = vsel %vm284, %v176, 0
      %v295 = vsel %vm284, %v177, 0
      %v298 = vsel %vm284, %v178, 0
      %v301 = vsel %vm284, %v179, 0
      %v304 = vsel %vm284, %v180, 0
      %v307 = vsel %vm284, %v181, 0
      %v310 = vsel %vm284, %v182, 0
      %v313 = vsel %vm284, %v183, 0
      %v316 = vsel %vm284, %v184, 0
      %v319 = vsel %vm284, %v185, 0
      %v322 = vsel %vm284, %v186, 0
      %v325 = vsel %vm284, %v187, 0
      %v328 = vsel %vm284, %v188, 0
      %v331 = vsel %vm284, %v189, 0
      %v334 = vsel %vm284, %v190, 0
      %v337 = vsel %vm284, %v191, 0
      %v340 = vsel %vm284, %v192, 0
      %v343 = vsel %vm284, %v193, 0
      %v346 = vsel %vm284, %v194, 0
      %v349 = vsel %vm284, %v195, 0
      %v352 = vsel %vm284, %v196, 0
      %v355 = vsel %vm284, %v197, 0
      %v358 = vsel %vm284, %v198, 0
      %v361 = vsel %vm284, %v199, 0
      %v364 = vsel %vm284, %v200, 0
      %v367 = vsel %vm284, %v201, 0
      %v370 = vsel %vm284, %v202, 0
      %v373 = vsel %vm284, %v203, 0
      %v376 = vsel %vm284, %v204, 0
      %v379 = vsel %vm284, %v205, 0
      %v382 = vsel %vm284, %v206, 0
      %v385 = vsel %vm284, %v207, 0
      %v388 = vsel %vm284, %v208, 0
      %v391 = vsel %vm284, %v209, 0
      %v394 = vsel %vm284, %v210, 0
      %v397 = vsel %vm284, %v211, 0
      %v400 = vsel %vm284, %v212, 0
      %v403 = vsel %vm284, %v213, 0
      %v406 = vsel %vm284, %v214, 0
      %v409 = vsel %vm284, %v215, 0
      %v412 = vsel %vm284, %v216, 0
      %v415 = vsel %vm284, %v217, 0
      %v418 = vsel %vm284, %v218, 0
      %v421 = vsel %vm284, %v219, 0
      %v424 = vsel %vm284, %v220, 0
      %v427 = vsel %vm284, %v221, 0
      %v430 = vsel %vm284, %v222, 0
      %v433 = vsel %vm284, %v223, 0
      %v436 = vsel %vm284, %v224, 0
      %v439 = vsel %vm284, %v225, 0
      %v442 = vsel %vm284, %v226, 0
      %v445 = vsel %vm284, %v227, 0
      %v448 = vsel %vm284, %v228, 0
      %v451 = vsel %vm284, %v229, 0
      %v454 = vsel %vm284, %v230, 0
      %v457 = vsel %vm284, %v231, 0
      %v460 = vsel %vm284, %v232, 0
      %v463 = vsel %vm284, %v233, 0
      %v466 = vsel %vm284, %v234, 0
      %v469 = vsel %vm284, %v235, 0
      %v472 = vsel %vm284, %v236, 0
      %v475 = vsel %vm284, %v237, 0
      %v478 = vsel %vm284, %v238, 0
      %v481 = vsel %vm284, %v239, 0
      %v484 = vsel %vm284, %v240, 0
      %v487 = vsel %vm284, %v241, 0
      %v490 = vsel %vm284, %v242, 0
      %v493 = vsel %vm284, %v243, 0
      %v496 = vsel %vm284, %v244, 0
      %v499 = vsel %vm284, %v245, 0
      %v502 = vsel %vm284, %v246, 0
      %v505 = vsel %vm284, %v247, 0
      %v508 = vsel %vm284, %v248, 0
      %v511 = vsel %vm284, %v249, 0
      %v514 = vsel %vm284, %v250, 0
      %v517 = vsel %vm284, %v251, 0
      %v520 = vsel %vm284, %v252, 0
      %v523 = vsel %vm284, %v253, 0
      %v526 = vsel %vm284, %v254, 0
      %v529 = vsel %vm284, %v255, 0
      %v532 = vsel %vm284, %v256, 0
      %v535 = vsel %vm284, %v257, 0
      %v538 = vsel %vm284, %v258, 0
      %v541 = vsel %vm284, %v259, 0
      %v544 = vsel %vm284, %v260, 0
      %v547 = vsel %vm284, %v261, 0
      %v550 = vsel %vm284, %v262, 0
      %v553 = vsel %vm284, %v263, 0
      %v556 = vsel %vm284, %v264, 0
      %v559 = vsel %vm284, %v265, 0
      %v562 = vsel %vm284, %v266, 0
      %v565 = vsel %vm284, %v267, 0
      %v568 = vsel %vm284, %v268, 0
      %v571 = vsel %vm284, %v269, 0
      %v574 = vsel %vm284, %v270, 0
      %v577 = vsel %vm284, %v271, 0
      %v580 = vsel %vm284, %v272, 0
      %v583 = vsel %vm284, %v273, 0
      %vm585 = vcmask 1042432
      %v587 = vsel %vm585, %v283, 0
      %589 = vmatprep.subr.mxu0 0.0
      %590 = vmatpush1.msra.mxu0 0.0
      %591 = vmatprep.subr.mxu0 0.0
      %592 = vmatpush1.msra.mxu0 0.0
      %593 = vmatprep.subr.mxu0 0.0
      %594 = vmatpush1.msra.mxu0 0.0
      %595 = vmatprep.subr.mxu0 0.0
      %596 = vmatpush1.msra.mxu0 0.0
      %597 = vmatprep.subr.mxu0 0.0
      %598 = vmatpush1.msra.mxu0 0.0
      %599 = vmatprep.subr.mxu0 0.0
      %600 = vmatpush1.msra.mxu0 0.0
      %601 = vmatprep.subr.mxu0 0.0
      %602 = vmatpush1.msra.mxu0 %v587
      %603 = vmatprep.subr.mxu0 0.0
      %604 = vmatpush1.msra.mxu0 %v282
      %605 = vmatprep.subr.mxu0 0.0
      %606 = vmatpush1.msra.mxu0 %v281
      %607 = vmatprep.subr.mxu0 0.0
      %608 = vmatpush1.msra.mxu0 %v280
      %609 = vmatprep.subr.mxu0 0.0
      %610 = vmatpush1.msra.mxu0 %v279
      %611 = vmatprep.subr.mxu0 0.0
      %612 = vmatpush1.msra.mxu0 %v278
      %613 = vmatprep.subr.mxu0 0.0
      %614 = vmatpush1.msra.mxu0 %v277
      %615 = vmatprep.subr.mxu0 0.0
      %616 = vmatpush1.msra.mxu0 %v276
      %617 = vmatprep.subr.mxu0 0.0
      %618 = vmatpush1.msra.mxu0 %v275
      %619 = vmatprep.subr.mxu0 0.0
      %620 = vmatpush1.msra.mxu0 %v274
      %621 = vmatprep.subr.mxu0 0.0
      %622 = vmatpush2.msra.mxu0 0.0
      %623 = vmatprep.subr.mxu0 0.0
      %624 = vmatpush2.msra.mxu0 0.0
      %625 = vmatprep.subr.mxu0 0.0
      %626 = vmatpush2.msra.mxu0 0.0
      %627 = vmatprep.subr.mxu0 0.0
      %628 = vmatpush2.msra.mxu0 0.0
      %629 = vmatprep.subr.mxu0 0.0
      %630 = vmatpush2.msra.mxu0 0.0
      %631 = vmatprep.subr.mxu0 0.0
      %632 = vmatpush2.msra.mxu0 0.0
      %633 = vmatprep.subr.mxu0 0.0
      %634 = vmatpush2.msra.mxu0 0.0
      %635 = vmatprep.subr.mxu0 0.0
      %636 = vmatpush2.msra.mxu0 0.0
      %637 = vmatprep.subr.mxu0 0.0
      %638 = vmatpush2.msra.mxu0 0.0
      %639 = vmatprep.subr.mxu0 0.0
      %640 = vmatpush2.msra.mxu0 0.0
      %641 = vmatprep.subr.mxu0 0.0
      %642 = vmatpush2.msra.mxu0 0.0
      %643 = vmatprep.subr.mxu0 0.0
      %644 = vmatpush2.msra.mxu0 0.0
      %645 = vmatprep.subr.mxu0 0.0
      %646 = vmatpush2.msra.mxu0 0.0
      %647 = vmatprep.subr.mxu0 0.0
      %648 = vmatpush2.msra.mxu0 0.0
      %649 = vmatprep.subr.mxu0 0.0
      %650 = vmatpush2.msra.mxu0 0.0
      %651 = vmatprep.subr.mxu0 0.0
      %652 = vmatpush2.msra.mxu0 0.0
      %653 = vmatprep.mubr.f32.mxu0 0.0
      %654 = vmatmul.mubr.f32.gmra.mxu0 %v286
      %v655 = vpop.f32.mrf.mxu0
      %v656 = vadd.f32 0.0, %v655
      %v657 = vpop.f32.mrf.mxu0
      %658 = vmatprep.mubr.f32.mxu0 0.0
      %659 = vmatmul.mubr.f32.gmra.mxu0 %v289
      %v660 = vpop.f32.mrf.mxu0
      %v661 = vadd.f32 0.0, %v660
      %v662 = vpop.f32.mrf.mxu0
      %663 = vmatprep.mubr.f32.mxu0 0.0
      %664 = vmatmul.mubr.f32.gmra.mxu0 %v292
      %v665 = vpop.f32.mrf.mxu0
      %v666 = vadd.f32 0.0, %v665
      %v667 = vpop.f32.mrf.mxu0
      %668 = vmatprep.mubr.f32.mxu0 0.0
      %669 = vmatmul.mubr.f32.gmra.mxu0 %v295
      %v670 = vpop.f32.mrf.mxu0
      %v671 = vadd.f32 0.0, %v670
      %v672 = vpop.f32.mrf.mxu0
      %673 = vmatprep.mubr.f32.mxu0 0.0
      %674 = vmatmul.mubr.f32.gmra.mxu0 %v298
      %v675 = vpop.f32.mrf.mxu0
      %v676 = vadd.f32 0.0, %v675
      %v677 = vpop.f32.mrf.mxu0
      %678 = vmatprep.mubr.f32.mxu0 0.0
      %679 = vmatmul.mubr.f32.gmra.mxu0 %v301
      %v680 = vpop.f32.mrf.mxu0
      %v681 = vadd.f32 0.0, %v680
      %v682 = vpop.f32.mrf.mxu0
      %683 = vmatprep.mubr.f32.mxu0 0.0
      %684 = vmatmul.mubr.f32.gmra.mxu0 %v304
      %v685 = vpop.f32.mrf.mxu0
      %v686 = vadd.f32 0.0, %v685
      %v687 = vpop.f32.mrf.mxu0
      %688 = vmatprep.mubr.f32.mxu0 0.0
      %689 = vmatmul.mubr.f32.gmra.mxu0 %v307
      %v690 = vpop.f32.mrf.mxu0
      %v691 = vadd.f32 0.0, %v690
      %v692 = vpop.f32.mrf.mxu0
      %693 = vmatprep.mubr.f32.mxu0 0.0
      %694 = vmatmul.mubr.f32.gmra.mxu0 %v310
      %v695 = vpop.f32.mrf.mxu0
      %v696 = vadd.f32 0.0, %v695
      %v697 = vpop.f32.mrf.mxu0
      %698 = vmatprep.mubr.f32.mxu0 0.0
      %699 = vmatmul.mubr.f32.gmra.mxu0 %v313
      %v700 = vpop.f32.mrf.mxu0
      %v701 = vadd.f32 0.0, %v700
      %v702 = vpop.f32.mrf.mxu0
      %703 = vmatprep.mubr.f32.mxu0 0.0
      %704 = vmatmul.mubr.f32.gmra.mxu0 %v316
      %v705 = vpop.f32.mrf.mxu0
      %v706 = vadd.f32 0.0, %v705
      %v707 = vpop.f32.mrf.mxu0
      %708 = vmatprep.mubr.f32.mxu0 0.0
      %709 = vmatmul.mubr.f32.gmra.mxu0 %v319
      %v710 = vpop.f32.mrf.mxu0
      %v711 = vadd.f32 0.0, %v710
      %v712 = vpop.f32.mrf.mxu0
      %713 = vmatprep.mubr.f32.mxu0 0.0
      %714 = vmatmul.mubr.f32.gmra.mxu0 %v322
      %v715 = vpop.f32.mrf.mxu0
      %v716 = vadd.f32 0.0, %v715
      %v717 = vpop.f32.mrf.mxu0
      %718 = vmatprep.mubr.f32.mxu0 0.0
      %719 = vmatmul.mubr.f32.gmra.mxu0 %v325
      %v720 = vpop.f32.mrf.mxu0
      %v721 = vadd.f32 0.0, %v720
      %v722 = vpop.f32.mrf.mxu0
      %723 = vmatprep.mubr.f32.mxu0 0.0
      %724 = vmatmul.mubr.f32.gmra.mxu0 %v328
      %v725 = vpop.f32.mrf.mxu0
      %v726 = vadd.f32 0.0, %v725
      %v727 = vpop.f32.mrf.mxu0
      %728 = vmatprep.mubr.f32.mxu0 0.0
      %729 = vmatmul.mubr.f32.gmra.mxu0 %v331
      %v730 = vpop.f32.mrf.mxu0
      %v731 = vadd.f32 0.0, %v730
      %v732 = vpop.f32.mrf.mxu0
      %733 = vmatprep.mubr.f32.mxu0 0.0
      %734 = vmatmul.mubr.f32.gmra.mxu0 %v334
      %v735 = vpop.f32.mrf.mxu0
      %v736 = vadd.f32 0.0, %v735
      %v737 = vpop.f32.mrf.mxu0
      %738 = vmatprep.mubr.f32.mxu0 0.0
      %739 = vmatmul.mubr.f32.gmra.mxu0 %v337
      %v740 = vpop.f32.mrf.mxu0
      %v741 = vadd.f32 0.0, %v740
      %v742 = vpop.f32.mrf.mxu0
      %743 = vmatprep.mubr.f32.mxu0 0.0
      %744 = vmatmul.mubr.f32.gmra.mxu0 %v340
      %v745 = vpop.f32.mrf.mxu0
      %v746 = vadd.f32 0.0, %v745
      %v747 = vpop.f32.mrf.mxu0
      %748 = vmatprep.mubr.f32.mxu0 0.0
      %749 = vmatmul.mubr.f32.gmra.mxu0 %v343
      %v750 = vpop.f32.mrf.mxu0
      %v751 = vadd.f32 0.0, %v750
      %v752 = vpop.f32.mrf.mxu0
      %753 = vmatprep.mubr.f32.mxu0 0.0
      %754 = vmatmul.mubr.f32.gmra.mxu0 %v346
      %v755 = vpop.f32.mrf.mxu0
      %v756 = vadd.f32 0.0, %v755
      %v757 = vpop.f32.mrf.mxu0
      %758 = vmatprep.mubr.f32.mxu0 0.0
      %759 = vmatmul.mubr.f32.gmra.mxu0 %v349
      %v760 = vpop.f32.mrf.mxu0
      %v761 = vadd.f32 0.0, %v760
      %v762 = vpop.f32.mrf.mxu0
      %763 = vmatprep.mubr.f32.mxu0 0.0
      %764 = vmatmul.mubr.f32.gmra.mxu0 %v352
      %v765 = vpop.f32.mrf.mxu0
      %v766 = vadd.f32 0.0, %v765
      %v767 = vpop.f32.mrf.mxu0
      %768 = vmatprep.mubr.f32.mxu0 0.0
      %769 = vmatmul.mubr.f32.gmra.mxu0 %v355
      %v770 = vpop.f32.mrf.mxu0
      %v771 = vadd.f32 0.0, %v770
      %v772 = vpop.f32.mrf.mxu0
      %773 = vmatprep.mubr.f32.mxu0 0.0
      %774 = vmatmul.mubr.f32.gmra.mxu0 %v358
      %v775 = vpop.f32.mrf.mxu0
      %v776 = vadd.f32 0.0, %v775
      %v777 = vpop.f32.mrf.mxu0
      %778 = vmatprep.mubr.f32.mxu0 0.0
      %779 = vmatmul.mubr.f32.gmra.mxu0 %v361
      %v780 = vpop.f32.mrf.mxu0
      %v781 = vadd.f32 0.0, %v780
      %v782 = vpop.f32.mrf.mxu0
      %783 = vmatprep.mubr.f32.mxu0 0.0
      %784 = vmatmul.mubr.f32.gmra.mxu0 %v364
      %v785 = vpop.f32.mrf.mxu0
      %v786 = vadd.f32 0.0, %v785
      %v787 = vpop.f32.mrf.mxu0
      %788 = vmatprep.mubr.f32.mxu0 0.0
      %789 = vmatmul.mubr.f32.gmra.mxu0 %v367
      %v790 = vpop.f32.mrf.mxu0
      %v791 = vadd.f32 0.0, %v790
      %v792 = vpop.f32.mrf.mxu0
      %793 = vmatprep.mubr.f32.mxu0 0.0
      %794 = vmatmul.mubr.f32.gmra.mxu0 %v370
      %v795 = vpop.f32.mrf.mxu0
      %v796 = vadd.f32 0.0, %v795
      %v797 = vpop.f32.mrf.mxu0
      %798 = vmatprep.mubr.f32.mxu0 0.0
      %799 = vmatmul.mubr.f32.gmra.mxu0 %v373
      %v800 = vpop.f32.mrf.mxu0
      %v801 = vadd.f32 0.0, %v800
      %v802 = vpop.f32.mrf.mxu0
      %803 = vmatprep.mubr.f32.mxu0 0.0
      %804 = vmatmul.mubr.f32.gmra.mxu0 %v376
      %v805 = vpop.f32.mrf.mxu0
      %v806 = vadd.f32 0.0, %v805
      %v807 = vpop.f32.mrf.mxu0
      %808 = vmatprep.mubr.f32.mxu0 0.0
      %809 = vmatmul.mubr.f32.gmra.mxu0 %v379
      %v810 = vpop.f32.mrf.mxu0
      %v811 = vadd.f32 0.0, %v810
      %v812 = vpop.f32.mrf.mxu0
      %813 = vmatprep.mubr.f32.mxu0 0.0
      %814 = vmatmul.mubr.f32.gmra.mxu0 %v382
      %v815 = vpop.f32.mrf.mxu0
      %v816 = vadd.f32 0.0, %v815
      %v817 = vpop.f32.mrf.mxu0
      %818 = vmatprep.mubr.f32.mxu0 0.0
      %819 = vmatmul.mubr.f32.gmra.mxu0 %v385
      %v820 = vpop.f32.mrf.mxu0
      %v821 = vadd.f32 0.0, %v820
      %v822 = vpop.f32.mrf.mxu0
      %823 = vmatprep.mubr.f32.mxu0 0.0
      %824 = vmatmul.mubr.f32.gmra.mxu0 %v388
      %v825 = vpop.f32.mrf.mxu0
      %v826 = vadd.f32 0.0, %v825
      %v827 = vpop.f32.mrf.mxu0
      %828 = vmatprep.mubr.f32.mxu0 0.0
      %829 = vmatmul.mubr.f32.gmra.mxu0 %v391
      %v830 = vpop.f32.mrf.mxu0
      %v831 = vadd.f32 0.0, %v830
      %v832 = vpop.f32.mrf.mxu0
      %833 = vmatprep.mubr.f32.mxu0 0.0
      %834 = vmatmul.mubr.f32.gmra.mxu0 %v394
      %v835 = vpop.f32.mrf.mxu0
      %v836 = vadd.f32 0.0, %v835
      %v837 = vpop.f32.mrf.mxu0
      %838 = vmatprep.mubr.f32.mxu0 0.0
      %839 = vmatmul.mubr.f32.gmra.mxu0 %v397
      %v840 = vpop.f32.mrf.mxu0
      %v841 = vadd.f32 0.0, %v840
      %v842 = vpop.f32.mrf.mxu0
      %843 = vmatprep.mubr.f32.mxu0 0.0
      %844 = vmatmul.mubr.f32.gmra.mxu0 %v400
      %v845 = vpop.f32.mrf.mxu0
      %v846 = vadd.f32 0.0, %v845
      %v847 = vpop.f32.mrf.mxu0
      %848 = vmatprep.mubr.f32.mxu0 0.0
      %849 = vmatmul.mubr.f32.gmra.mxu0 %v403
      %v850 = vpop.f32.mrf.mxu0
      %v851 = vadd.f32 0.0, %v850
      %v852 = vpop.f32.mrf.mxu0
      %853 = vmatprep.mubr.f32.mxu0 0.0
      %854 = vmatmul.mubr.f32.gmra.mxu0 %v406
      %v855 = vpop.f32.mrf.mxu0
      %v856 = vadd.f32 0.0, %v855
      %v857 = vpop.f32.mrf.mxu0
      %858 = vmatprep.mubr.f32.mxu0 0.0
      %859 = vmatmul.mubr.f32.gmra.mxu0 %v409
      %v860 = vpop.f32.mrf.mxu0
      %v861 = vadd.f32 0.0, %v860
      %v862 = vpop.f32.mrf.mxu0
      %863 = vmatprep.mubr.f32.mxu0 0.0
      %864 = vmatmul.mubr.f32.gmra.mxu0 %v412
      %v865 = vpop.f32.mrf.mxu0
      %v866 = vadd.f32 0.0, %v865
      %v867 = vpop.f32.mrf.mxu0
      %868 = vmatprep.mubr.f32.mxu0 0.0
      %869 = vmatmul.mubr.f32.gmra.mxu0 %v415
      %v870 = vpop.f32.mrf.mxu0
      %v871 = vadd.f32 0.0, %v870
      %v872 = vpop.f32.mrf.mxu0
      %873 = vmatprep.mubr.f32.mxu0 0.0
      %874 = vmatmul.mubr.f32.gmra.mxu0 %v418
      %v875 = vpop.f32.mrf.mxu0
      %v876 = vadd.f32 0.0, %v875
      %v877 = vpop.f32.mrf.mxu0
      %878 = vmatprep.mubr.f32.mxu0 0.0
      %879 = vmatmul.mubr.f32.gmra.mxu0 %v421
      %v880 = vpop.f32.mrf.mxu0
      %v881 = vadd.f32 0.0, %v880
      %v882 = vpop.f32.mrf.mxu0
      %883 = vmatprep.mubr.f32.mxu0 0.0
      %884 = vmatmul.mubr.f32.gmra.mxu0 %v424
      %v885 = vpop.f32.mrf.mxu0
      %v886 = vadd.f32 0.0, %v885
      %v887 = vpop.f32.mrf.mxu0
      %888 = vmatprep.mubr.f32.mxu0 0.0
      %889 = vmatmul.mubr.f32.gmra.mxu0 %v427
      %v890 = vpop.f32.mrf.mxu0
      %v891 = vadd.f32 0.0, %v890
      %v892 = vpop.f32.mrf.mxu0
      %893 = vmatprep.mubr.f32.mxu0 0.0
      %894 = vmatmul.mubr.f32.gmra.mxu0 %v430
      %v895 = vpop.f32.mrf.mxu0
      %v896 = vadd.f32 0.0, %v895
      %v897 = vpop.f32.mrf.mxu0
      %898 = vmatprep.mubr.f32.mxu0 0.0
      %899 = vmatmul.mubr.f32.gmra.mxu0 %v433
      %v900 = vpop.f32.mrf.mxu0
      %v901 = vadd.f32 0.0, %v900
      %v902 = vpop.f32.mrf.mxu0
      %903 = vmatprep.mubr.f32.mxu0 0.0
      %904 = vmatmul.mubr.f32.gmra.mxu0 %v436
      %v905 = vpop.f32.mrf.mxu0
      %v906 = vadd.f32 0.0, %v905
      %v907 = vpop.f32.mrf.mxu0
      %908 = vmatprep.mubr.f32.mxu0 0.0
      %909 = vmatmul.mubr.f32.gmra.mxu0 %v439
      %v910 = vpop.f32.mrf.mxu0
      %v911 = vadd.f32 0.0, %v910
      %v912 = vpop.f32.mrf.mxu0
      %913 = vmatprep.mubr.f32.mxu0 0.0
      %914 = vmatmul.mubr.f32.gmra.mxu0 %v442
      %v915 = vpop.f32.mrf.mxu0
      %v916 = vadd.f32 0.0, %v915
      %v917 = vpop.f32.mrf.mxu0
      %918 = vmatprep.mubr.f32.mxu0 0.0
      %919 = vmatmul.mubr.f32.gmra.mxu0 %v445
      %v920 = vpop.f32.mrf.mxu0
      %v921 = vadd.f32 0.0, %v920
      %v922 = vpop.f32.mrf.mxu0
      %923 = vmatprep.mubr.f32.mxu0 0.0
      %924 = vmatmul.mubr.f32.gmra.mxu0 %v448
      %v925 = vpop.f32.mrf.mxu0
      %v926 = vadd.f32 0.0, %v925
      %v927 = vpop.f32.mrf.mxu0
      %928 = vmatprep.mubr.f32.mxu0 0.0
      %929 = vmatmul.mubr.f32.gmra.mxu0 %v451
      %v930 = vpop.f32.mrf.mxu0
      %v931 = vadd.f32 0.0, %v930
      %v932 = vpop.f32.mrf.mxu0
      %933 = vmatprep.mubr.f32.mxu0 0.0
      %934 = vmatmul.mubr.f32.gmra.mxu0 %v454
      %v935 = vpop.f32.mrf.mxu0
      %v936 = vadd.f32 0.0, %v935
      %v937 = vpop.f32.mrf.mxu0
      %938 = vmatprep.mubr.f32.mxu0 0.0
      %939 = vmatmul.mubr.f32.gmra.mxu0 %v457
      %v940 = vpop.f32.mrf.mxu0
      %v941 = vadd.f32 0.0, %v940
      %v942 = vpop.f32.mrf.mxu0
      %943 = vmatprep.mubr.f32.mxu0 0.0
      %944 = vmatmul.mubr.f32.gmra.mxu0 %v460
      %v945 = vpop.f32.mrf.mxu0
      %v946 = vadd.f32 0.0, %v945
      %v947 = vpop.f32.mrf.mxu0
      %948 = vmatprep.mubr.f32.mxu0 0.0
      %949 = vmatmul.mubr.f32.gmra.mxu0 %v463
      %v950 = vpop.f32.mrf.mxu0
      %v951 = vadd.f32 0.0, %v950
      %v952 = vpop.f32.mrf.mxu0
      %953 = vmatprep.mubr.f32.mxu0 0.0
      %954 = vmatmul.mubr.f32.gmra.mxu0 %v466
      %v955 = vpop.f32.mrf.mxu0
      %v956 = vadd.f32 0.0, %v955
      %v957 = vpop.f32.mrf.mxu0
      %958 = vmatprep.mubr.f32.mxu0 0.0
      %959 = vmatmul.mubr.f32.gmra.mxu0 %v469
      %v960 = vpop.f32.mrf.mxu0
      %v961 = vadd.f32 0.0, %v960
      %v962 = vpop.f32.mrf.mxu0
      %963 = vmatprep.mubr.f32.mxu0 0.0
      %964 = vmatmul.mubr.f32.gmra.mxu0 %v472
      %v965 = vpop.f32.mrf.mxu0
      %v966 = vadd.f32 0.0, %v965
      %v967 = vpop.f32.mrf.mxu0
      %968 = vmatprep.mubr.f32.mxu0 0.0
      %969 = vmatmul.mubr.f32.gmra.mxu0 %v475
      %v970 = vpop.f32.mrf.mxu0
      %v971 = vadd.f32 0.0, %v970
      %v972 = vpop.f32.mrf.mxu0
      %973 = vmatprep.mubr.f32.mxu0 0.0
      %974 = vmatmul.mubr.f32.gmra.mxu0 %v478
      %v975 = vpop.f32.mrf.mxu0
      %v976 = vadd.f32 0.0, %v975
      %v977 = vpop.f32.mrf.mxu0
      %978 = vmatprep.mubr.f32.mxu0 0.0
      %979 = vmatmul.mubr.f32.gmra.mxu0 %v481
      %v980 = vpop.f32.mrf.mxu0
      %v981 = vadd.f32 0.0, %v980
      %v982 = vpop.f32.mrf.mxu0
      %983 = vmatprep.mubr.f32.mxu0 0.0
      %984 = vmatmul.mubr.f32.gmra.mxu0 %v484
      %v985 = vpop.f32.mrf.mxu0
      %v986 = vadd.f32 0.0, %v985
      %v987 = vpop.f32.mrf.mxu0
      %988 = vmatprep.mubr.f32.mxu0 0.0
      %989 = vmatmul.mubr.f32.gmra.mxu0 %v487
      %v990 = vpop.f32.mrf.mxu0
      %v991 = vadd.f32 0.0, %v990
      %v992 = vpop.f32.mrf.mxu0
      %993 = vmatprep.mubr.f32.mxu0 0.0
      %994 = vmatmul.mubr.f32.gmra.mxu0 %v490
      %v995 = vpop.f32.mrf.mxu0
      %v996 = vadd.f32 0.0, %v995
      %v997 = vpop.f32.mrf.mxu0
      %998 = vmatprep.mubr.f32.mxu0 0.0
      %999 = vmatmul.mubr.f32.gmra.mxu0 %v493
      %v1000 = vpop.f32.mrf.mxu0
      %v1001 = vadd.f32 0.0, %v1000
      %v1002 = vpop.f32.mrf.mxu0
      %1003 = vmatprep.mubr.f32.mxu0 0.0
      %1004 = vmatmul.mubr.f32.gmra.mxu0 %v496
      %v1005 = vpop.f32.mrf.mxu0
      %v1006 = vadd.f32 0.0, %v1005
      %v1007 = vpop.f32.mrf.mxu0
      %1008 = vmatprep.mubr.f32.mxu0 0.0
      %1009 = vmatmul.mubr.f32.gmra.mxu0 %v499
      %v1010 = vpop.f32.mrf.mxu0
      %v1011 = vadd.f32 0.0, %v1010
      %v1012 = vpop.f32.mrf.mxu0
      %1013 = vmatprep.mubr.f32.mxu0 0.0
      %1014 = vmatmul.mubr.f32.gmra.mxu0 %v502
      %v1015 = vpop.f32.mrf.mxu0
      %v1016 = vadd.f32 0.0, %v1015
      %v1017 = vpop.f32.mrf.mxu0
      %1018 = vmatprep.mubr.f32.mxu0 0.0
      %1019 = vmatmul.mubr.f32.gmra.mxu0 %v505
      %v1020 = vpop.f32.mrf.mxu0
      %v1021 = vadd.f32 0.0, %v1020
      %v1022 = vpop.f32.mrf.mxu0
      %1023 = vmatprep.mubr.f32.mxu0 0.0
      %1024 = vmatmul.mubr.f32.gmra.mxu0 %v508
      %v1025 = vpop.f32.mrf.mxu0
      %v1026 = vadd.f32 0.0, %v1025
      %v1027 = vpop.f32.mrf.mxu0
      %1028 = vmatprep.mubr.f32.mxu0 0.0
      %1029 = vmatmul.mubr.f32.gmra.mxu0 %v511
      %v1030 = vpop.f32.mrf.mxu0
      %v1031 = vadd.f32 0.0, %v1030
      %v1032 = vpop.f32.mrf.mxu0
      %1033 = vmatprep.mubr.f32.mxu0 0.0
      %1034 = vmatmul.mubr.f32.gmra.mxu0 %v514
      %v1035 = vpop.f32.mrf.mxu0
      %v1036 = vadd.f32 0.0, %v1035
      %v1037 = vpop.f32.mrf.mxu0
      %1038 = vmatprep.mubr.f32.mxu0 0.0
      %1039 = vmatmul.mubr.f32.gmra.mxu0 %v517
      %v1040 = vpop.f32.mrf.mxu0
      %v1041 = vadd.f32 0.0, %v1040
      %v1042 = vpop.f32.mrf.mxu0
      %1043 = vmatprep.mubr.f32.mxu0 0.0
      %1044 = vmatmul.mubr.f32.gmra.mxu0 %v520
      %v1045 = vpop.f32.mrf.mxu0
      %v1046 = vadd.f32 0.0, %v1045
      %v1047 = vpop.f32.mrf.mxu0
      %1048 = vmatprep.mubr.f32.mxu0 0.0
      %1049 = vmatmul.mubr.f32.gmra.mxu0 %v523
      %v1050 = vpop.f32.mrf.mxu0
      %v1051 = vadd.f32 0.0, %v1050
      %v1052 = vpop.f32.mrf.mxu0
      %1053 = vmatprep.mubr.f32.mxu0 0.0
      %1054 = vmatmul.mubr.f32.gmra.mxu0 %v526
      %v1055 = vpop.f32.mrf.mxu0
      %v1056 = vadd.f32 0.0, %v1055
      %v1057 = vpop.f32.mrf.mxu0
      %1058 = vmatprep.mubr.f32.mxu0 0.0
      %1059 = vmatmul.mubr.f32.gmra.mxu0 %v529
      %v1060 = vpop.f32.mrf.mxu0
      %v1061 = vadd.f32 0.0, %v1060
      %v1062 = vpop.f32.mrf.mxu0
      %1063 = vmatprep.mubr.f32.mxu0 0.0
      %1064 = vmatmul.mubr.f32.gmra.mxu0 %v532
      %v1065 = vpop.f32.mrf.mxu0
      %v1066 = vadd.f32 0.0, %v1065
      %v1067 = vpop.f32.mrf.mxu0
      %1068 = vmatprep.mubr.f32.mxu0 0.0
      %1069 = vmatmul.mubr.f32.gmra.mxu0 %v535
      %v1070 = vpop.f32.mrf.mxu0
      %v1071 = vadd.f32 0.0, %v1070
      %v1072 = vpop.f32.mrf.mxu0
      %1073 = vmatprep.mubr.f32.mxu0 0.0
      %1074 = vmatmul.mubr.f32.gmra.mxu0 %v538
      %v1075 = vpop.f32.mrf.mxu0
      %v1076 = vadd.f32 0.0, %v1075
      %v1077 = vpop.f32.mrf.mxu0
      %1078 = vmatprep.mubr.f32.mxu0 0.0
      %1079 = vmatmul.mubr.f32.gmra.mxu0 %v541
      %v1080 = vpop.f32.mrf.mxu0
      %v1081 = vadd.f32 0.0, %v1080
      %v1082 = vpop.f32.mrf.mxu0
      %1083 = vmatprep.mubr.f32.mxu0 0.0
      %1084 = vmatmul.mubr.f32.gmra.mxu0 %v544
      %v1085 = vpop.f32.mrf.mxu0
      %v1086 = vadd.f32 0.0, %v1085
      %v1087 = vpop.f32.mrf.mxu0
      %1088 = vmatprep.mubr.f32.mxu0 0.0
      %1089 = vmatmul.mubr.f32.gmra.mxu0 %v547
      %v1090 = vpop.f32.mrf.mxu0
      %v1091 = vadd.f32 0.0, %v1090
      %v1092 = vpop.f32.mrf.mxu0
      %1093 = vmatprep.mubr.f32.mxu0 0.0
      %1094 = vmatmul.mubr.f32.gmra.mxu0 %v550
      %v1095 = vpop.f32.mrf.mxu0
      %v1096 = vadd.f32 0.0, %v1095
      %v1097 = vpop.f32.mrf.mxu0
      %1098 = vmatprep.mubr.f32.mxu0 0.0
      %1099 = vmatmul.mubr.f32.gmra.mxu0 %v553
      %v1100 = vpop.f32.mrf.mxu0
      %v1101 = vadd.f32 0.0, %v1100
      %v1102 = vpop.f32.mrf.mxu0
      %1103 = vmatprep.mubr.f32.mxu0 0.0
      %1104 = vmatmul.mubr.f32.gmra.mxu0 %v556
      %v1105 = vpop.f32.mrf.mxu0
      %v1106 = vadd.f32 0.0, %v1105
      %v1107 = vpop.f32.mrf.mxu0
      %1108 = vmatprep.mubr.f32.mxu0 0.0
      %1109 = vmatmul.mubr.f32.gmra.mxu0 %v559
      %v1110 = vpop.f32.mrf.mxu0
      %v1111 = vadd.f32 0.0, %v1110
      %v1112 = vpop.f32.mrf.mxu0
      %1113 = vmatprep.mubr.f32.mxu0 0.0
      %1114 = vmatmul.mubr.f32.gmra.mxu0 %v562
      %v1115 = vpop.f32.mrf.mxu0
      %v1116 = vadd.f32 0.0, %v1115
      %v1117 = vpop.f32.mrf.mxu0
      %1118 = vmatprep.mubr.f32.mxu0 0.0
      %1119 = vmatmul.mubr.f32.gmra.mxu0 %v565
      %v1120 = vpop.f32.mrf.mxu0
      %v1121 = vadd.f32 0.0, %v1120
      %v1122 = vpop.f32.mrf.mxu0
      %1123 = vmatprep.mubr.f32.mxu0 0.0
      %1124 = vmatmul.mubr.f32.gmra.mxu0 %v568
      %v1125 = vpop.f32.mrf.mxu0
      %v1126 = vadd.f32 0.0, %v1125
      %v1127 = vpop.f32.mrf.mxu0
      %1128 = vmatprep.mubr.f32.mxu0 0.0
      %1129 = vmatmul.mubr.f32.gmra.mxu0 %v571
      %v1130 = vpop.f32.mrf.mxu0
      %v1131 = vadd.f32 0.0, %v1130
      %v1132 = vpop.f32.mrf.mxu0
      %1133 = vmatprep.mubr.f32.mxu0 0.0
      %1134 = vmatmul.mubr.f32.gmra.mxu0 %v574
      %v1135 = vpop.f32.mrf.mxu0
      %v1136 = vadd.f32 0.0, %v1135
      %v1137 = vpop.f32.mrf.mxu0
      %1138 = vmatprep.mubr.f32.mxu0 0.0
      %1139 = vmatmul.mubr.f32.gmra.mxu0 %v577
      %v1140 = vpop.f32.mrf.mxu0
      %v1141 = vadd.f32 0.0, %v1140
      %v1142 = vpop.f32.mrf.mxu0
      %1143 = vmatprep.mubr.f32.mxu0 0.0
      %1144 = vmatmul.mubr.f32.gmra.mxu0 %v580
      %v1145 = vpop.f32.mrf.mxu0
      %v1146 = vadd.f32 0.0, %v1145
      %v1147 = vpop.f32.mrf.mxu0
      %1148 = vmatprep.mubr.f32.mxu0 0.0
      %1149 = vmatmul.mubr.f32.gmra.mxu0 %v583
      %v1150 = vpop.f32.mrf.mxu0
      %v1151 = vadd.f32 0.0, %v1150
      %v1152 = vpop.f32.mrf.mxu0
      %1153 = vdwg.mxu0
      %v1154 = vmax.f32 %v656, %v781
      %v1155 = vmax.f32 %v661, %v786
      %v1156 = vmax.f32 %v666, %v791
      %v1157 = vmax.f32 %v671, %v796
      %v1158 = vmax.f32 %v676, %v801
      %v1159 = vmax.f32 %v681, %v806
      %v1160 = vmax.f32 %v686, %v811
      %v1161 = vmax.f32 %v691, %v816
      %v1162 = vmax.f32 %v696, %v821
      %v1163 = vmax.f32 %v701, %v826
      %v1164 = vmax.f32 %v706, %v831
      %v1165 = vmax.f32 %v711, %v836
      %v1166 = vmax.f32 %v716, %v841
      %v1167 = vmax.f32 %v721, %v846
      %v1168 = vmax.f32 %v726, %v851
      %v1169 = vmax.f32 %v731, %v856
      %v1170 = vmax.f32 %v736, %v861
      %v1171 = vmax.f32 %v741, %v866
      %v1172 = vmax.f32 %v746, %v871
      %v1173 = vmax.f32 %v751, %v876
      %v1174 = vmax.f32 %v756, %v881
      %v1175 = vmax.f32 %v761, %v886
      %v1176 = vmax.f32 %v766, %v891
      %v1177 = vmax.f32 %v771, %v896
      %v1178 = vmax.f32 %v776, %v901
      %v1179 = vmax.f32 %v906, %v1031
      %v1180 = vmax.f32 %v911, %v1036
      %v1181 = vmax.f32 %v916, %v1041
      %v1182 = vmax.f32 %v921, %v1046
      %v1183 = vmax.f32 %v926, %v1051
      %v1184 = vmax.f32 %v931, %v1056
      %v1185 = vmax.f32 %v936, %v1061
      %v1186 = vmax.f32 %v941, %v1066
      %v1187 = vmax.f32 %v946, %v1071
      %v1188 = vmax.f32 %v951, %v1076
      %v1189 = vmax.f32 %v956, %v1081
      %v1190 = vmax.f32 %v961, %v1086
      %v1191 = vmax.f32 %v966, %v1091
      %v1192 = vmax.f32 %v971, %v1096
      %v1193 = vmax.f32 %v976, %v1101
      %v1194 = vmax.f32 %v981, %v1106
      %v1195 = vmax.f32 %v986, %v1111
      %v1196 = vmax.f32 %v991, %v1116
      %v1197 = vmax.f32 %v996, %v1121
      %v1198 = vmax.f32 %v1001, %v1126
      %v1199 = vmax.f32 %v1006, %v1131
      %v1200 = vmax.f32 %v1011, %v1136
      %v1201 = vmax.f32 %v1016, %v1141
      %v1202 = vmax.f32 %v1021, %v1146
      %v1203 = vmax.f32 %v1026, %v1151
      %v1204 = vmax.f32 %v1154, %v1179
      %v1205 = vmax.f32 %v1155, %v1180
      %v1206 = vmax.f32 %v1156, %v1181
      %v1207 = vmax.f32 %v1157, %v1182
      %v1208 = vmax.f32 %v1158, %v1183
      %v1209 = vmax.f32 %v1159, %v1184
      %v1210 = vmax.f32 %v1160, %v1185
      %v1211 = vmax.f32 %v1161, %v1186
      %v1212 = vmax.f32 %v1162, %v1187
      %v1213 = vmax.f32 %v1163, %v1188
      %v1214 = vmax.f32 %v1164, %v1189
      %v1215 = vmax.f32 %v1165, %v1190
      %v1216 = vmax.f32 %v1166, %v1191
      %v1217 = vmax.f32 %v1167, %v1192
      %v1218 = vmax.f32 %v1168, %v1193
      %v1219 = vmax.f32 %v1169, %v1194
      %v1220 = vmax.f32 %v1170, %v1195
      %v1221 = vmax.f32 %v1171, %v1196
      %v1222 = vmax.f32 %v1172, %v1197
      %v1223 = vmax.f32 %v1173, %v1198
      %v1224 = vmax.f32 %v1174, %v1199
      %v1225 = vmax.f32 %v1175, %v1200
      %v1226 = vmax.f32 %v1176, %v1201
      %v1227 = vmax.f32 %v1177, %v1202
      %v1228 = vmax.f32 %v1178, %v1203
      %v1229 = vld [vmem:[%s2] sm:$0x1]
      %v1231 = vlaneseq
      %v1232 = vshrl.u32 %v1231, 7
      %v1233 = vsub.s32 0, %v1232
      %v1234 = vrot.slane %v1229, %v1233
      %v1236 = vadd.f32 %v1204, %v1234
      %v1237 = vadd.f32 %v1205, %v1234
      %v1238 = vadd.f32 %v1206, %v1234
      %v1239 = vadd.f32 %v1207, %v1234
      %v1240 = vadd.f32 %v1208, %v1234
      %v1241 = vadd.f32 %v1209, %v1234
      %v1242 = vadd.f32 %v1210, %v1234
      %v1243 = vadd.f32 %v1211, %v1234
      %v1244 = vadd.f32 %v1212, %v1234
      %v1245 = vadd.f32 %v1213, %v1234
      %v1246 = vadd.f32 %v1214, %v1234
      %v1247 = vadd.f32 %v1215, %v1234
      %v1248 = vadd.f32 %v1216, %v1234
      %v1249 = vadd.f32 %v1217, %v1234
      %v1250 = vadd.f32 %v1218, %v1234
      %v1251 = vadd.f32 %v1219, %v1234
      %v1252 = vadd.f32 %v1220, %v1234
      %v1253 = vadd.f32 %v1221, %v1234
      %v1254 = vadd.f32 %v1222, %v1234
      %v1255 = vadd.f32 %v1223, %v1234
      %v1256 = vadd.f32 %v1224, %v1234
      %v1257 = vadd.f32 %v1225, %v1234
      %v1258 = vadd.f32 %v1226, %v1234
      %v1259 = vadd.f32 %v1227, %v1234
      %v1260 = vadd.f32 %v1228, %v1234
      %v1261 = vmax.f32 %v1236, 0.0
      %v1262 = vmax.f32 %v1237, 0.0
      %v1263 = vmax.f32 %v1238, 0.0
      %v1264 = vmax.f32 %v1239, 0.0
      %v1265 = vmax.f32 %v1240, 0.0
      %v1266 = vmax.f32 %v1241, 0.0
      %v1267 = vmax.f32 %v1242, 0.0
      %v1268 = vmax.f32 %v1243, 0.0
      %v1269 = vmax.f32 %v1244, 0.0
      %v1270 = vmax.f32 %v1245, 0.0
      %v1271 = vmax.f32 %v1246, 0.0
      %v1272 = vmax.f32 %v1247, 0.0
      %v1273 = vmax.f32 %v1248, 0.0
      %v1274 = vmax.f32 %v1249, 0.0
      %v1275 = vmax.f32 %v1250, 0.0
      %v1276 = vmax.f32 %v1251, 0.0
      %v1277 = vmax.f32 %v1252, 0.0
      %v1278 = vmax.f32 %v1253, 0.0
      %v1279 = vmax.f32 %v1254, 0.0
      %v1280 = vmax.f32 %v1255, 0.0
      %v1281 = vmax.f32 %v1256, 0.0
      %v1282 = vmax.f32 %v1257, 0.0
      %v1283 = vmax.f32 %v1258, 0.0
      %v1284 = vmax.f32 %v1259, 0.0
      %v1285 = vmax.f32 %v1260, 0.0
      %1286 = vst [vmem:[%s172] sm:$0xff] %v1261
      %1287 = vst [vmem:[%s172 + $0x8] sm:$0xff] %v1262
      %1288 = vst [vmem:[%s172 + $0x10] sm:$0xff] %v1263
      %1289 = vst [vmem:[%s172 + $0x18] sm:$0xff] %v1264
      %1290 = vst [vmem:[%s172 + $0x20] sm:$0xff] %v1265
      %1291 = vst [vmem:[%s172 + $0x28] sm:$0xff] %v1266
      %1292 = vst [vmem:[%s172 + $0x30] sm:$0xff] %v1267
      %1293 = vst [vmem:[%s172 + $0x38] sm:$0xff] %v1268
      %1294 = vst [vmem:[%s172 + $0x40] sm:$0xff] %v1269
      %1295 = vst [vmem:[%s172 + $0x48] sm:$0xff] %v1270
      %1296 = vst [vmem:[%s172 + $0x50] sm:$0xff] %v1271
      %1297 = vst [vmem:[%s172 + $0x58] sm:$0xff] %v1272
      %1298 = vst [vmem:[%s172 + $0x60] sm:$0xff] %v1273
      %1299 = vst [vmem:[%s172 + $0x68] sm:$0xff] %v1274
      %1300 = vst [vmem:[%s172 + $0x70] sm:$0xff] %v1275
      %1301 = vst [vmem:[%s172 + $0x78] sm:$0xff] %v1276
      %1302 = vst [vmem:[%s172 + $0x80] sm:$0xff] %v1277
      %1303 = vst [vmem:[%s172 + $0x88] sm:$0xff] %v1278
      %1304 = vst [vmem:[%s172 + $0x90] sm:$0xff] %v1279
      %1305 = vst [vmem:[%s172 + $0x98] sm:$0xff] %v1280
      %1306 = vst [vmem:[%s172 + $0xa0] sm:$0xff] %v1281
      %1307 = vst [vmem:[%s172 + $0xa8] sm:$0xff] %v1282
      %1308 = vst [vmem:[%s172 + $0xb0] sm:$0xff] %v1283
      %1309 = vst [vmem:[%s172 + $0xb8] sm:$0xff] %v1284
      %1310 = vst [vmem:[%s172 + $0xc0] sm:$0xff] %v1285
      %s1311 = smul.u32 25, %s14
      %p1312 = scmp.lt.s32.totalorder %s1311, 49
      %s1313 = scalar_select %p1312, %s1311, 49
      %s1314 = smul.addr %s1313, 8
      %s1315 = scalar_lea.vmem %s3, %s1314
      // Predicated region
      $region33: #{forward.3} parent=31 // pred_check
        %p1316 = pneg %p100
      $region34: #{forward.3} parent=31 // pred_check_branch
        %1318 = sbr.rel (%p1316) target = $region36
      $region35: #{forward.3} parent=31 // pred_region
        %s1319 = smul.u32 25, %s14
      $region36: #{forward.3} parent=31 // pred_fallthru
        _
    $region32: #{forward.3} parent=5 // pred_fallthru
      _
    %p1320 = scmp.le.s32.totalorder 2, %s9
    // Predicated region
    $region37: #{forward.3} parent=5 // pred_check
      %p1321 = pneg %p1320
    $region38: #{forward.3} parent=5 // pred_check_branch
      %1323 = sbr.rel (%p1321) target = $region40
    $region39: #{forward.3} parent=5 // pred_region
      %s1324 = ssub.s32 %s9, 2
      // Predicated region
      $region41: #{forward.3} parent=39 // pred_check
        %p1325 = pneg %p106
      $region42: #{forward.3} parent=39 // pred_check_branch
        %1327 = sbr.rel (%p1325) target = $region44
      $region43: #{forward.3} parent=39 // pred_region
        %s1328 = smul.u32 25, %s15
        %p1329 = scmp.lt.s32.totalorder %s1328, 49
        %s1330 = scalar_select %p1329, %s1328, 49
        %s1331 = smul.addr %s1330, 8
        %s1332 = scalar_lea.vmem %s3, %s1331
      $region44: #{forward.3} parent=39 // pred_fallthru
        _
    $region40: #{forward.3} parent=5 // pred_fallthru
      _
  $region6: #{forward.3} parent=0 // loop_footer
    %s13 = sadd.s32 1, %s9
  $region7: #{forward.3} parent=0 // loop_footer_branch
    %8 = sbr.rel target = $region3
  $region8: #{forward.3} parent=0 // loop_exit
    _

// kernel: forward.4
$region0: #{forward.4}
  #allocation0 [shape = 'u32[]', space=smem, size = 0x4, offset = 0x4, fixed_abs, tag = 'smem constant byte address 0x4 - core index']
  #allocation1 [shape = 'u32[144,128]{1,0:T(1,128)}', space=vmem, size = 0x12000, scoped, tag = 'internal scratch']
  %s0 = inlined_call_operand.vmem [shape: f32[224,150], index: 0, kind: input, shape index: {}]
  %s1 = inlined_call_operand.vmem [shape: f32[150,128], index: 1, kind: input, shape index: {}]
  %s2 = inlined_call_operand.vmem [shape: f32[1,128], index: 2, kind: input, shape index: {}]
  %s3 = inlined_call_operand.vmem [shape: f32[56,128], index: 3, kind: output, shape index: {}]
  %s4 = sld [smem:[#allocation0]]
  $region22: #{forward.4} parent=0
    _
  %s6 = ssub.s32 1, %s4
  %s7 = scalar_select 0, %s6, %s4
  // Predicated region
  $region2: #{forward.4} parent=0 // pred_check
    _
  $region3: #{forward.4} parent=0 // pred_check_branch
    %9 = sbr.rel (0) target = $region5
  $region4: #{forward.4} parent=0 // pred_region
    _
  $region5: #{forward.4} parent=0 // pred_fallthru
    _
  // Predicated region
  $region6: #{forward.4} parent=0 // pred_check
    _
  $region7: #{forward.4} parent=0 // pred_check_branch
    %11 = sbr.rel (0) target = $region9
  $region8: #{forward.4} parent=0 // pred_region
    _
  $region9: #{forward.4} parent=0 // pred_fallthru
    _
  // Predicated region
  $region10: #{forward.4} parent=0 // pred_check
    _
  $region11: #{forward.4} parent=0 // pred_check_branch
    %13 = sbr.rel (0) target = $region13
  $region12: #{forward.4} parent=0 // pred_region
    _
  $region13: #{forward.4} parent=0 // pred_fallthru
    _
  %v14 = vld [vmem:[%s0] sm:$0xff]
  %v15 = vld [vmem:[%s0 + $0x8] sm:$0xff]
  %v16 = vld [vmem:[%s0 + $0x10] sm:$0xff]
  %v17 = vld [vmem:[%s0 + $0x18] sm:$0xff]
  %v18 = vld [vmem:[%s0 + $0x20] sm:$0xff]
  %v19 = vld [vmem:[%s0 + $0x28] sm:$0xff]
  %v20 = vld [vmem:[%s0 + $0x30] sm:$0xff]
  %v21 = vld [vmem:[%s0 + $0x38] sm:$0xff]
  %v22 = vld [vmem:[%s0 + $0x40] sm:$0xff]
  %v23 = vld [vmem:[%s0 + $0x48] sm:$0xff]
  %v24 = vld [vmem:[%s0 + $0x50] sm:$0xff]
  %v25 = vld [vmem:[%s0 + $0x58] sm:$0xff]
  %v26 = vld [vmem:[%s0 + $0x60] sm:$0xff]
  %v27 = vld [vmem:[%s0 + $0x68] sm:$0xff]
  %v28 = vld [vmem:[%s0 + $0x70] sm:$0xff]
  %v29 = vld [vmem:[%s0 + $0x78] sm:$0xff]
  %v30 = vld [vmem:[%s0 + $0x80] sm:$0xff]
  %v31 = vld [vmem:[%s0 + $0x88] sm:$0xff]
  %v32 = vld [vmem:[%s0 + $0x90] sm:$0xff]
  %v33 = vld [vmem:[%s0 + $0x98] sm:$0xff]
  %v34 = vld [vmem:[%s0 + $0xa0] sm:$0xff]
  %v35 = vld [vmem:[%s0 + $0xa8] sm:$0xff]
  %v36 = vld [vmem:[%s0 + $0xb0] sm:$0xff]
  %v37 = vld [vmem:[%s0 + $0xb8] sm:$0xff]
  %v38 = vld [vmem:[%s0 + $0xc0] sm:$0xff]
  %v39 = vld [vmem:[%s0 + $0xc8] sm:$0xff]
  %v40 = vld [vmem:[%s0 + $0xd0] sm:$0xff]
  %v41 = vld [vmem:[%s0 + $0xd8] sm:$0xff]
  %v42 = vld [vmem:[%s0 + $0xe0] sm:$0xff]
  %v43 = vld [vmem:[%s0 + $0xe8] sm:$0xff]
  %v44 = vld [vmem:[%s0 + $0xf0] sm:$0xff]
  %v45 = vld [vmem:[%s0 + $0xf8] sm:$0xff]
  %v46 = vld [vmem:[%s0 + $0x100] sm:$0xff]
  %v47 = vld [vmem:[%s0 + $0x108] sm:$0xff]
  %v48 = vld [vmem:[%s0 + $0x110] sm:$0xff]
  %v49 = vld [vmem:[%s0 + $0x118] sm:$0xff]
  %v50 = vld [vmem:[%s0 + $0x120] sm:$0xff]
  %v51 = vld [vmem:[%s0 + $0x128] sm:$0xff]
  %v52 = vld [vmem:[%s0 + $0x130] sm:$0xff]
  %v53 = vld [vmem:[%s0 + $0x138] sm:$0xff]
  %v54 = vld [vmem:[%s0 + $0x140] sm:$0xff]
  %v55 = vld [vmem:[%s0 + $0x148] sm:$0xff]
  %v56 = vld [vmem:[%s0 + $0x150] sm:$0xff]
  %v57 = vld [vmem:[%s0 + $0x158] sm:$0xff]
  %v58 = vld [vmem:[%s0 + $0x160] sm:$0xff]
  %v59 = vld [vmem:[%s0 + $0x168] sm:$0xff]
  %v60 = vld [vmem:[%s0 + $0x170] sm:$0xff]
  %v61 = vld [vmem:[%s0 + $0x178] sm:$0xff]
  %v62 = vld [vmem:[%s0 + $0x180] sm:$0xff]
  %v63 = vld [vmem:[%s0 + $0x188] sm:$0xff]
  %v64 = vld [vmem:[%s0 + $0x190] sm:$0xff]
  %v65 = vld [vmem:[%s0 + $0x198] sm:$0xff]
  %v66 = vld [vmem:[%s0 + $0x1a0] sm:$0xff]
  %v67 = vld [vmem:[%s0 + $0x1a8] sm:$0xff]
  %v68 = vld [vmem:[%s0 + $0x1b0] sm:$0xff]
  %v69 = vld [vmem:[%s0 + $0x1b8] sm:$0xff]
  %v70 = vld [vmem:[%s1] sm:$0xff]
  %v71 = vld [vmem:[%s1 + $0x8] sm:$0xff]
  %v72 = vld [vmem:[%s1 + $0x10] sm:$0xff]
  %v73 = vld [vmem:[%s1 + $0x18] sm:$0xff]
  %v74 = vld [vmem:[%s1 + $0x20] sm:$0xff]
  %v75 = vld [vmem:[%s1 + $0x28] sm:$0xff]
  %v76 = vld [vmem:[%s1 + $0x30] sm:$0xff]
  %v77 = vld [vmem:[%s1 + $0x38] sm:$0xff]
  %v78 = vld [vmem:[%s1 + $0x40] sm:$0xff]
  %v79 = vld [vmem:[%s1 + $0x48] sm:$0xff]
  %v80 = vld [vmem:[%s1 + $0x50] sm:$0xff]
  %v81 = vld [vmem:[%s1 + $0x58] sm:$0xff]
  %v82 = vld [vmem:[%s1 + $0x60] sm:$0xff]
  %v83 = vld [vmem:[%s1 + $0x68] sm:$0xff]
  %v84 = vld [vmem:[%s1 + $0x70] sm:$0xff]
  %v85 = vld [vmem:[%s1 + $0x78] sm:$0xff]
  %v86 = vld [vmem:[%s1 + $0x80] sm:$0xff]
  %v87 = vld [vmem:[%s1 + $0x88] sm:$0xff]
  %v88 = vld [vmem:[%s1 + $0x90] sm:$0x3f]
  %vm89 = vcmask 179200
  %v91 = vsel %vm89, %v15, 0
  %v94 = vsel %vm89, %v17, 0
  %v97 = vsel %vm89, %v19, 0
  %v100 = vsel %vm89, %v21, 0
  %v103 = vsel %vm89, %v23, 0
  %v106 = vsel %vm89, %v25, 0
  %v109 = vsel %vm89, %v27, 0
  %v112 = vsel %vm89, %v29, 0
  %v115 = vsel %vm89, %v31, 0
  %v118 = vsel %vm89, %v33, 0
  %v121 = vsel %vm89, %v35, 0
  %v124 = vsel %vm89, %v37, 0
  %v127 = vsel %vm89, %v39, 0
  %v130 = vsel %vm89, %v41, 0
  %v133 = vsel %vm89, %v43, 0
  %v136 = vsel %vm89, %v45, 0
  %v139 = vsel %vm89, %v47, 0
  %v142 = vsel %vm89, %v49, 0
  %v145 = vsel %vm89, %v51, 0
  %v148 = vsel %vm89, %v53, 0
  %v151 = vsel %vm89, %v55, 0
  %v154 = vsel %vm89, %v57, 0
  %v157 = vsel %vm89, %v59, 0
  %v160 = vsel %vm89, %v61, 0
  %v163 = vsel %vm89, %v63, 0
  %v166 = vsel %vm89, %v65, 0
  %v169 = vsel %vm89, %v67, 0
  %v172 = vsel %vm89, %v69, 0
  %vm174 = vcmask 1045504
  %v176 = vsel %vm174, %v88, 0
  %178 = vmatprep.subr.mxu0 0.0
  %179 = vmatpush1.msra.mxu0 %v85
  %180 = vmatprep.subr.mxu0 0.0
  %181 = vmatpush1.msra.mxu0 %v84
  %182 = vmatprep.subr.mxu0 0.0
  %183 = vmatpush1.msra.mxu0 %v83
  %184 = vmatprep.subr.mxu0 0.0
  %185 = vmatpush1.msra.mxu0 %v82
  %186 = vmatprep.subr.mxu0 0.0
  %187 = vmatpush1.msra.mxu0 %v81
  %188 = vmatprep.subr.mxu0 0.0
  %189 = vmatpush1.msra.mxu0 %v80
  %190 = vmatprep.subr.mxu0 0.0
  %191 = vmatpush1.msra.mxu0 %v79
  %192 = vmatprep.subr.mxu0 0.0
  %193 = vmatpush1.msra.mxu0 %v78
  %194 = vmatprep.subr.mxu0 0.0
  %195 = vmatpush1.msra.mxu0 %v77
  %196 = vmatprep.subr.mxu0 0.0
  %197 = vmatpush1.msra.mxu0 %v76
  %198 = vmatprep.subr.mxu0 0.0
  %199 = vmatpush1.msra.mxu0 %v75
  %200 = vmatprep.subr.mxu0 0.0
  %201 = vmatpush1.msra.mxu0 %v74
  %202 = vmatprep.subr.mxu0 0.0
  %203 = vmatpush1.msra.mxu0 %v73
  %204 = vmatprep.subr.mxu0 0.0
  %205 = vmatpush1.msra.mxu0 %v72
  %206 = vmatprep.subr.mxu0 0.0
  %207 = vmatpush1.msra.mxu0 %v71
  %208 = vmatprep.subr.mxu0 0.0
  %209 = vmatpush1.msra.mxu0 %v70
  %210 = vmatprep.subr.mxu0 0.0
  %211 = vmatpush2.msra.mxu0 0.0
  %212 = vmatprep.subr.mxu0 0.0
  %213 = vmatpush2.msra.mxu0 0.0
  %214 = vmatprep.subr.mxu0 0.0
  %215 = vmatpush2.msra.mxu0 0.0
  %216 = vmatprep.subr.mxu0 0.0
  %217 = vmatpush2.msra.mxu0 0.0
  %218 = vmatprep.subr.mxu0 0.0
  %219 = vmatpush2.msra.mxu0 0.0
  %220 = vmatprep.subr.mxu0 0.0
  %221 = vmatpush2.msra.mxu0 0.0
  %222 = vmatprep.subr.mxu0 0.0
  %223 = vmatpush2.msra.mxu0 0.0
  %224 = vmatprep.subr.mxu0 0.0
  %225 = vmatpush2.msra.mxu0 0.0
  %226 = vmatprep.subr.mxu0 0.0
  %227 = vmatpush2.msra.mxu0 0.0
  %228 = vmatprep.subr.mxu0 0.0
  %229 = vmatpush2.msra.mxu0 0.0
  %230 = vmatprep.subr.mxu0 0.0
  %231 = vmatpush2.msra.mxu0 0.0
  %232 = vmatprep.subr.mxu0 0.0
  %233 = vmatpush2.msra.mxu0 0.0
  %234 = vmatprep.subr.mxu0 0.0
  %235 = vmatpush2.msra.mxu0 0.0
  %236 = vmatprep.subr.mxu0 0.0
  %237 = vmatpush2.msra.mxu0 %v176
  %238 = vmatprep.subr.mxu0 0.0
  %239 = vmatpush2.msra.mxu0 %v87
  %240 = vmatprep.subr.mxu0 0.0
  %241 = vmatpush2.msra.mxu0 %v86
  %242 = vmatprep.mubr.f32.mxu0 %v91
  %243 = vmatmul.mubr.f32.gmra.mxu0 %v14
  %v244 = vpop.f32.mrf.mxu0
  %v245 = vadd.f32 0.0, %v244
  %v246 = vpop.f32.mrf.mxu0
  %247 = vmatprep.mubr.f32.mxu0 %v94
  %248 = vmatmul.mubr.f32.gmra.mxu0 %v16
  %v249 = vpop.f32.mrf.mxu0
  %v250 = vadd.f32 0.0, %v249
  %v251 = vpop.f32.mrf.mxu0
  %252 = vmatprep.mubr.f32.mxu0 %v97
  %253 = vmatmul.mubr.f32.gmra.mxu0 %v18
  %v254 = vpop.f32.mrf.mxu0
  %v255 = vadd.f32 0.0, %v254
  %v256 = vpop.f32.mrf.mxu0
  %257 = vmatprep.mubr.f32.mxu0 %v100
  %258 = vmatmul.mubr.f32.gmra.mxu0 %v20
  %v259 = vpop.f32.mrf.mxu0
  %v260 = vadd.f32 0.0, %v259
  %v261 = vpop.f32.mrf.mxu0
  %262 = vmatprep.mubr.f32.mxu0 %v103
  %263 = vmatmul.mubr.f32.gmra.mxu0 %v22
  %v264 = vpop.f32.mrf.mxu0
  %v265 = vadd.f32 0.0, %v264
  %v266 = vpop.f32.mrf.mxu0
  %267 = vmatprep.mubr.f32.mxu0 %v106
  %268 = vmatmul.mubr.f32.gmra.mxu0 %v24
  %v269 = vpop.f32.mrf.mxu0
  %v270 = vadd.f32 0.0, %v269
  %v271 = vpop.f32.mrf.mxu0
  %272 = vmatprep.mubr.f32.mxu0 %v109
  %273 = vmatmul.mubr.f32.gmra.mxu0 %v26
  %v274 = vpop.f32.mrf.mxu0
  %v275 = vadd.f32 0.0, %v274
  %v276 = vpop.f32.mrf.mxu0
  %277 = vmatprep.mubr.f32.mxu0 %v112
  %278 = vmatmul.mubr.f32.gmra.mxu0 %v28
  %v279 = vpop.f32.mrf.mxu0
  %v280 = vadd.f32 0.0, %v279
  %v281 = vpop.f32.mrf.mxu0
  %282 = vmatprep.mubr.f32.mxu0 %v115
  %283 = vmatmul.mubr.f32.gmra.mxu0 %v30
  %v284 = vpop.f32.mrf.mxu0
  %v285 = vadd.f32 0.0, %v284
  %v286 = vpop.f32.mrf.mxu0
  %287 = vmatprep.mubr.f32.mxu0 %v118
  %288 = vmatmul.mubr.f32.gmra.mxu0 %v32
  %v289 = vpop.f32.mrf.mxu0
  %v290 = vadd.f32 0.0, %v289
  %v291 = vpop.f32.mrf.mxu0
  %292 = vmatprep.mubr.f32.mxu0 %v121
  %293 = vmatmul.mubr.f32.gmra.mxu0 %v34
  %v294 = vpop.f32.mrf.mxu0
  %v295 = vadd.f32 0.0, %v294
  %v296 = vpop.f32.mrf.mxu0
  %297 = vmatprep.mubr.f32.mxu0 %v124
  %298 = vmatmul.mubr.f32.gmra.mxu0 %v36
  %v299 = vpop.f32.mrf.mxu0
  %v300 = vadd.f32 0.0, %v299
  %v301 = vpop.f32.mrf.mxu0
  %302 = vmatprep.mubr.f32.mxu0 %v127
  %303 = vmatmul.mubr.f32.gmra.mxu0 %v38
  %v304 = vpop.f32.mrf.mxu0
  %v305 = vadd.f32 0.0, %v304
  %v306 = vpop.f32.mrf.mxu0
  %307 = vmatprep.mubr.f32.mxu0 %v130
  %308 = vmatmul.mubr.f32.gmra.mxu0 %v40
  %v309 = vpop.f32.mrf.mxu0
  %v310 = vadd.f32 0.0, %v309
  %v311 = vpop.f32.mrf.mxu0
  %312 = vmatprep.mubr.f32.mxu0 %v133
  %313 = vmatmul.mubr.f32.gmra.mxu0 %v42
  %v314 = vpop.f32.mrf.mxu0
  %v315 = vadd.f32 0.0, %v314
  %v316 = vpop.f32.mrf.mxu0
  %317 = vmatprep.mubr.f32.mxu0 %v136
  %318 = vmatmul.mubr.f32.gmra.mxu0 %v44
  %v319 = vpop.f32.mrf.mxu0
  %v320 = vadd.f32 0.0, %v319
  %v321 = vpop.f32.mrf.mxu0
  %322 = vmatprep.mubr.f32.mxu0 %v139
  %323 = vmatmul.mubr.f32.gmra.mxu0 %v46
  %v324 = vpop.f32.mrf.mxu0
  %v325 = vadd.f32 0.0, %v324
  %v326 = vpop.f32.mrf.mxu0
  %327 = vmatprep.mubr.f32.mxu0 %v142
  %328 = vmatmul.mubr.f32.gmra.mxu0 %v48
  %v329 = vpop.f32.mrf.mxu0
  %v330 = vadd.f32 0.0, %v329
  %v331 = vpop.f32.mrf.mxu0
  %332 = vmatprep.mubr.f32.mxu0 %v145
  %333 = vmatmul.mubr.f32.gmra.mxu0 %v50
  %v334 = vpop.f32.mrf.mxu0
  %v335 = vadd.f32 0.0, %v334
  %v336 = vpop.f32.mrf.mxu0
  %337 = vmatprep.mubr.f32.mxu0 %v148
  %338 = vmatmul.mubr.f32.gmra.mxu0 %v52
  %v339 = vpop.f32.mrf.mxu0
  %v340 = vadd.f32 0.0, %v339
  %v341 = vpop.f32.mrf.mxu0
  %342 = vmatprep.mubr.f32.mxu0 %v151
  %343 = vmatmul.mubr.f32.gmra.mxu0 %v54
  %v344 = vpop.f32.mrf.mxu0
  %v345 = vadd.f32 0.0, %v344
  %v346 = vpop.f32.mrf.mxu0
  %347 = vmatprep.mubr.f32.mxu0 %v154
  %348 = vmatmul.mubr.f32.gmra.mxu0 %v56
  %v349 = vpop.f32.mrf.mxu0
  %v350 = vadd.f32 0.0, %v349
  %v351 = vpop.f32.mrf.mxu0
  %352 = vmatprep.mubr.f32.mxu0 %v157
  %353 = vmatmul.mubr.f32.gmra.mxu0 %v58
  %v354 = vpop.f32.mrf.mxu0
  %v355 = vadd.f32 0.0, %v354
  %v356 = vpop.f32.mrf.mxu0
  %357 = vmatprep.mubr.f32.mxu0 %v160
  %358 = vmatmul.mubr.f32.gmra.mxu0 %v60
  %v359 = vpop.f32.mrf.mxu0
  %v360 = vadd.f32 0.0, %v359
  %v361 = vpop.f32.mrf.mxu0
  %362 = vmatprep.mubr.f32.mxu0 %v163
  %363 = vmatmul.mubr.f32.gmra.mxu0 %v62
  %v364 = vpop.f32.mrf.mxu0
  %v365 = vadd.f32 0.0, %v364
  %v366 = vpop.f32.mrf.mxu0
  %367 = vmatprep.mubr.f32.mxu0 %v166
  %368 = vmatmul.mubr.f32.gmra.mxu0 %v64
  %v369 = vpop.f32.mrf.mxu0
  %v370 = vadd.f32 0.0, %v369
  %v371 = vpop.f32.mrf.mxu0
  %372 = vmatprep.mubr.f32.mxu0 %v169
  %373 = vmatmul.mubr.f32.gmra.mxu0 %v66
  %v374 = vpop.f32.mrf.mxu0
  %v375 = vadd.f32 0.0, %v374
  %v376 = vpop.f32.mrf.mxu0
  %377 = vmatprep.mubr.f32.mxu0 %v172
  %378 = vmatmul.mubr.f32.gmra.mxu0 %v68
  %v379 = vpop.f32.mrf.mxu0
  %v380 = vadd.f32 0.0, %v379
  %v381 = vpop.f32.mrf.mxu0
  %382 = vdwg.mxu0
  %v383 = vmax.f32 %v245, %v280
  %v384 = vmax.f32 %v250, %v285
  %v385 = vmax.f32 %v255, %v290
  %v386 = vmax.f32 %v260, %v295
  %v387 = vmax.f32 %v265, %v300
  %v388 = vmax.f32 %v270, %v305
  %v389 = vmax.f32 %v275, %v310
  %v390 = vmax.f32 %v315, %v350
  %v391 = vmax.f32 %v320, %v355
  %v392 = vmax.f32 %v325, %v360
  %v393 = vmax.f32 %v330, %v365
  %v394 = vmax.f32 %v335, %v370
  %v395 = vmax.f32 %v340, %v375
  %v396 = vmax.f32 %v345, %v380
  %v397 = vmax.f32 %v383, %v390
  %v398 = vmax.f32 %v384, %v391
  %v399 = vmax.f32 %v385, %v392
  %v400 = vmax.f32 %v386, %v393
  %v401 = vmax.f32 %v387, %v394
  %v402 = vmax.f32 %v388, %v395
  %v403 = vmax.f32 %v389, %v396
  %v404 = vld [vmem:[%s2] sm:$0x1]
  %v406 = vlaneseq
  %v407 = vshrl.u32 %v406, 7
  %v408 = vsub.s32 0, %v407
  %v409 = vrot.slane %v404, %v408
  %v411 = vadd.f32 %v397, %v409
  %v412 = vadd.f32 %v398, %v409
  %v413 = vadd.f32 %v399, %v409
  %v414 = vadd.f32 %v400, %v409
  %v415 = vadd.f32 %v401, %v409
  %v416 = vadd.f32 %v402, %v409
  %v417 = vadd.f32 %v403, %v409
  %v418 = vmax.f32 %v411, 0.0
  %v419 = vmax.f32 %v412, 0.0
  %v420 = vmax.f32 %v413, 0.0
  %v421 = vmax.f32 %v414, 0.0
  %v422 = vmax.f32 %v415, 0.0
  %v423 = vmax.f32 %v416, 0.0
  %v424 = vmax.f32 %v417, 0.0
  %425 = vst [vmem:[%s3] sm:$0xff] %v418
  %426 = vst [vmem:[%s3 + $0x8] sm:$0xff] %v419
  %427 = vst [vmem:[%s3 + $0x10] sm:$0xff] %v420
  %428 = vst [vmem:[%s3 + $0x18] sm:$0xff] %v421
  %429 = vst [vmem:[%s3 + $0x20] sm:$0xff] %v422
  %430 = vst [vmem:[%s3 + $0x28] sm:$0xff] %v423
  %431 = vst [vmem:[%s3 + $0x30] sm:$0xff] %v424
  // Predicated region
  $region14: #{forward.4} parent=0 // pred_check
    _
  $region15: #{forward.4} parent=0 // pred_check_branch
    %433 = sbr.rel (0) target = $region17
  $region16: #{forward.4} parent=0 // pred_region
    _
  $region17: #{forward.4} parent=0 // pred_fallthru
    _
  // Predicated region
  $region18: #{forward.4} parent=0 // pred_check
    _
  $region19: #{forward.4} parent=0 // pred_check_branch
    %435 = sbr.rel (0) target = $region21
  $region20: #{forward.4} parent=0 // pred_region
    _
  $region21: #{forward.4} parent=0 // pred_fallthru
    _

// kernel: forward.5
$region0: #{forward.5}
  #allocation0 [shape = 'u32[]', space=smem, size = 0x4, offset = 0x4, fixed_abs, tag = 'smem constant byte address 0x4 - core index']
  #allocation1 [shape = 'u32[144,128]{1,0:T(1,128)}', space=vmem, size = 0x12000, scoped, tag = 'internal scratch']
  %s0 = inlined_call_operand.vmem [shape: f32[8,400], index: 0, kind: input, shape index: {}]
  %s1 = inlined_call_operand.vmem [shape: f32[400,120], index: 1, kind: input, shape index: {}]
  %s2 = inlined_call_operand.vmem [shape: f32[1,120], index: 2, kind: input, shape index: {}]
  %s3 = inlined_call_operand.vmem [shape: f32[120,84], index: 3, kind: input, shape index: {}]
  %s4 = inlined_call_operand.vmem [shape: f32[1,84], index: 4, kind: input, shape index: {}]
  %s5 = inlined_call_operand.vmem [shape: f32[84,10], index: 5, kind: input, shape index: {}]
  %s6 = inlined_call_operand.vmem [shape: f32[1,10], index: 6, kind: input, shape index: {}]
  %s7 = inlined_call_operand.vmem [shape: f32[8,10], index: 7, kind: output, shape index: {}]
  %s8 = sld [smem:[#allocation0]]
  $region38: #{forward.5} parent=0
    _
  %s10 = ssub.s32 1, %s8
  %s11 = scalar_select 0, %s10, %s8
  // Predicated region
  $region2: #{forward.5} parent=0 // pred_check
    _
  $region3: #{forward.5} parent=0 // pred_check_branch
    %13 = sbr.rel (0) target = $region5
  $region4: #{forward.5} parent=0 // pred_region
    _
  $region5: #{forward.5} parent=0 // pred_fallthru
    _
  // Predicated region
  $region6: #{forward.5} parent=0 // pred_check
    _
  $region7: #{forward.5} parent=0 // pred_check_branch
    %15 = sbr.rel (0) target = $region9
  $region8: #{forward.5} parent=0 // pred_region
    _
  $region9: #{forward.5} parent=0 // pred_fallthru
    _
  // Predicated region
  $region10: #{forward.5} parent=0 // pred_check
    _
  $region11: #{forward.5} parent=0 // pred_check_branch
    %17 = sbr.rel (0) target = $region13
  $region12: #{forward.5} parent=0 // pred_region
    _
  $region13: #{forward.5} parent=0 // pred_fallthru
    _
  // Predicated region
  $region14: #{forward.5} parent=0 // pred_check
    _
  $region15: #{forward.5} parent=0 // pred_check_branch
    %19 = sbr.rel (0) target = $region17
  $region16: #{forward.5} parent=0 // pred_region
    _
  $region17: #{forward.5} parent=0 // pred_fallthru
    _
  // Predicated region
  $region18: #{forward.5} parent=0 // pred_check
    _
  $region19: #{forward.5} parent=0 // pred_check_branch
    %21 = sbr.rel (0) target = $region21
  $region20: #{forward.5} parent=0 // pred_region
    _
  $region21: #{forward.5} parent=0 // pred_fallthru
    _
  // Predicated region
  $region22: #{forward.5} parent=0 // pred_check
    _
  $region23: #{forward.5} parent=0 // pred_check_branch
    %23 = sbr.rel (0) target = $region25
  $region24: #{forward.5} parent=0 // pred_region
    _
  $region25: #{forward.5} parent=0 // pred_fallthru
    _
  // Predicated region
  $region26: #{forward.5} parent=0 // pred_check
    _
  $region27: #{forward.5} parent=0 // pred_check_branch
    %25 = sbr.rel (0) target = $region29
  $region28: #{forward.5} parent=0 // pred_region
    _
  $region29: #{forward.5} parent=0 // pred_fallthru
    _
  %v26 = vld [vmem:[%s0] sm:$0xff]
  %v27 = vld [vmem:[%s0 + $0x8] sm:$0xff]
  %v28 = vld [vmem:[%s0 + $0x10] sm:$0xff]
  %v29 = vld [vmem:[%s0 + $0x18] sm:$0xff]
  %v30 = vld [vmem:[%s1] sm:$0xff]
  %v31 = vld [vmem:[%s1 + $0x8] sm:$0xff]
  %v32 = vld [vmem:[%s1 + $0x10] sm:$0xff]
  %v33 = vld [vmem:[%s1 + $0x18] sm:$0xff]
  %v34 = vld [vmem:[%s1 + $0x20] sm:$0xff]
  %v35 = vld [vmem:[%s1 + $0x28] sm:$0xff]
  %v36 = vld [vmem:[%s1 + $0x30] sm:$0xff]
  %v37 = vld [vmem:[%s1 + $0x38] sm:$0xff]
  %v38 = vld [vmem:[%s1 + $0x40] sm:$0xff]
  %v39 = vld [vmem:[%s1 + $0x48] sm:$0xff]
  %v40 = vld [vmem:[%s1 + $0x50] sm:$0xff]
  %v41 = vld [vmem:[%s1 + $0x58] sm:$0xff]
  %v42 = vld [vmem:[%s1 + $0x60] sm:$0xff]
  %v43 = vld [vmem:[%s1 + $0x68] sm:$0xff]
  %v44 = vld [vmem:[%s1 + $0x70] sm:$0xff]
  %v45 = vld [vmem:[%s1 + $0x78] sm:$0xff]
  %v46 = vld [vmem:[%s1 + $0x80] sm:$0xff]
  %v47 = vld [vmem:[%s1 + $0x88] sm:$0xff]
  %v48 = vld [vmem:[%s1 + $0x90] sm:$0xff]
  %v49 = vld [vmem:[%s1 + $0x98] sm:$0xff]
  %v50 = vld [vmem:[%s1 + $0xa0] sm:$0xff]
  %v51 = vld [vmem:[%s1 + $0xa8] sm:$0xff]
  %v52 = vld [vmem:[%s1 + $0xb0] sm:$0xff]
  %v53 = vld [vmem:[%s1 + $0xb8] sm:$0xff]
  %v54 = vld [vmem:[%s1 + $0xc0] sm:$0xff]
  %v55 = vld [vmem:[%s1 + $0xc8] sm:$0xff]
  %v56 = vld [vmem:[%s1 + $0xd0] sm:$0xff]
  %v57 = vld [vmem:[%s1 + $0xd8] sm:$0xff]
  %v58 = vld [vmem:[%s1 + $0xe0] sm:$0xff]
  %v59 = vld [vmem:[%s1 + $0xe8] sm:$0xff]
  %v60 = vld [vmem:[%s1 + $0xf0] sm:$0xff]
  %v61 = vld [vmem:[%s1 + $0xf8] sm:$0xff]
  %v62 = vld [vmem:[%s1 + $0x100] sm:$0xff]
  %v63 = vld [vmem:[%s1 + $0x108] sm:$0xff]
  %v64 = vld [vmem:[%s1 + $0x110] sm:$0xff]
  %v65 = vld [vmem:[%s1 + $0x118] sm:$0xff]
  %v66 = vld [vmem:[%s1 + $0x120] sm:$0xff]
  %v67 = vld [vmem:[%s1 + $0x128] sm:$0xff]
  %v68 = vld [vmem:[%s1 + $0x130] sm:$0xff]
  %v69 = vld [vmem:[%s1 + $0x138] sm:$0xff]
  %v70 = vld [vmem:[%s1 + $0x140] sm:$0xff]
  %v71 = vld [vmem:[%s1 + $0x148] sm:$0xff]
  %v72 = vld [vmem:[%s1 + $0x150] sm:$0xff]
  %v73 = vld [vmem:[%s1 + $0x158] sm:$0xff]
  %v74 = vld [vmem:[%s1 + $0x160] sm:$0xff]
  %v75 = vld [vmem:[%s1 + $0x168] sm:$0xff]
  %v76 = vld [vmem:[%s1 + $0x170] sm:$0xff]
  %v77 = vld [vmem:[%s1 + $0x178] sm:$0xff]
  %v78 = vld [vmem:[%s1 + $0x180] sm:$0xff]
  %v79 = vld [vmem:[%s1 + $0x188] sm:$0xff]
  %v80 = vld [vmem:[%s2] sm:$0x1]
  %v82 = vlaneseq
  %v83 = vshrl.u32 %v82, 7
  %v84 = vsub.s32 0, %v83
  %v85 = vrot.slane %v80, %v84
  %vm87 = vcmask 130048
  %v89 = vsel %vm87, %v29, 0
  %91 = vmatprep.subr.mxu0 0.0
  %92 = vmatpush1.msra.mxu0 %v45
  %93 = vmatprep.subr.mxu0 0.0
  %94 = vmatpush1.msra.mxu0 %v44
  %95 = vmatprep.subr.mxu0 0.0
  %96 = vmatpush1.msra.mxu0 %v43
  %97 = vmatprep.subr.mxu0 0.0
  %98 = vmatpush1.msra.mxu0 %v42
  %99 = vmatprep.subr.mxu0 0.0
  %100 = vmatpush1.msra.mxu0 %v41
  %101 = vmatprep.subr.mxu0 0.0
  %102 = vmatpush1.msra.mxu0 %v40
  %103 = vmatprep.subr.mxu0 0.0
  %104 = vmatpush1.msra.mxu0 %v39
  %105 = vmatprep.subr.mxu0 0.0
  %106 = vmatpush1.msra.mxu0 %v38
  %107 = vmatprep.subr.mxu0 0.0
  %108 = vmatpush1.msra.mxu0 %v37
  %109 = vmatprep.subr.mxu0 0.0
  %110 = vmatpush1.msra.mxu0 %v36
  %111 = vmatprep.subr.mxu0 0.0
  %112 = vmatpush1.msra.mxu0 %v35
  %113 = vmatprep.subr.mxu0 0.0
  %114 = vmatpush1.msra.mxu0 %v34
  %115 = vmatprep.subr.mxu0 0.0
  %116 = vmatpush1.msra.mxu0 %v33
  %117 = vmatprep.subr.mxu0 0.0
  %118 = vmatpush1.msra.mxu0 %v32
  %119 = vmatprep.subr.mxu0 0.0
  %120 = vmatpush1.msra.mxu0 %v31
  %121 = vmatprep.subr.mxu0 0.0
  %122 = vmatpush1.msra.mxu0 %v30
  %123 = vmatprep.subr.mxu0 0.0
  %124 = vmatpush2.msra.mxu0 %v61
  %125 = vmatprep.subr.mxu0 0.0
  %126 = vmatpush2.msra.mxu0 %v60
  %127 = vmatprep.subr.mxu0 0.0
  %128 = vmatpush2.msra.mxu0 %v59
  %129 = vmatprep.subr.mxu0 0.0
  %130 = vmatpush2.msra.mxu0 %v58
  %131 = vmatprep.subr.mxu0 0.0
  %132 = vmatpush2.msra.mxu0 %v57
  %133 = vmatprep.subr.mxu0 0.0
  %134 = vmatpush2.msra.mxu0 %v56
  %135 = vmatprep.subr.mxu0 0.0
  %136 = vmatpush2.msra.mxu0 %v55
  %137 = vmatprep.subr.mxu0 0.0
  %138 = vmatpush2.msra.mxu0 %v54
  %139 = vmatprep.subr.mxu0 0.0
  %140 = vmatpush2.msra.mxu0 %v53
  %141 = vmatprep.subr.mxu0 0.0
  %142 = vmatpush2.msra.mxu0 %v52
  %143 = vmatprep.subr.mxu0 0.0
  %144 = vmatpush2.msra.mxu0 %v51
  %145 = vmatprep.subr.mxu0 0.0
  %146 = vmatpush2.msra.mxu0 %v50
  %147 = vmatprep.subr.mxu0 0.0
  %148 = vmatpush2.msra.mxu0 %v49
  %149 = vmatprep.subr.mxu0 0.0
  %150 = vmatpush2.msra.mxu0 %v48
  %151 = vmatprep.subr.mxu0 0.0
  %152 = vmatpush2.msra.mxu0 %v47
  %153 = vmatprep.subr.mxu0 0.0
  %154 = vmatpush2.msra.mxu0 %v46
  %155 = vmatprep.mubr.f32.mxu0 %v27
  %156 = vmatmul.mubr.f32.gmra.mxu0 %v26
  %v157 = vpop.f32.mrf.mxu0
  %v158 = vadd.f32 %v85, %v157
  %v159 = vpop.f32.mrf.mxu0
  %160 = vdwg.mxu0
  %161 = vmatprep.subr.mxu0 0.0
  %162 = vmatpush1.msra.mxu0 %v77
  %163 = vmatprep.subr.mxu0 0.0
  %164 = vmatpush1.msra.mxu0 %v76
  %165 = vmatprep.subr.mxu0 0.0
  %166 = vmatpush1.msra.mxu0 %v75
  %167 = vmatprep.subr.mxu0 0.0
  %168 = vmatpush1.msra.mxu0 %v74
  %169 = vmatprep.subr.mxu0 0.0
  %170 = vmatpush1.msra.mxu0 %v73
  %171 = vmatprep.subr.mxu0 0.0
  %172 = vmatpush1.msra.mxu0 %v72
  %173 = vmatprep.subr.mxu0 0.0
  %174 = vmatpush1.msra.mxu0 %v71
  %175 = vmatprep.subr.mxu0 0.0
  %176 = vmatpush1.msra.mxu0 %v70
  %177 = vmatprep.subr.mxu0 0.0
  %178 = vmatpush1.msra.mxu0 %v69
  %179 = vmatprep.subr.mxu0 0.0
  %180 = vmatpush1.msra.mxu0 %v68
  %181 = vmatprep.subr.mxu0 0.0
  %182 = vmatpush1.msra.mxu0 %v67
  %183 = vmatprep.subr.mxu0 0.0
  %184 = vmatpush1.msra.mxu0 %v66
  %185 = vmatprep.subr.mxu0 0.0
  %186 = vmatpush1.msra.mxu0 %v65
  %187 = vmatprep.subr.mxu0 0.0
  %188 = vmatpush1.msra.mxu0 %v64
  %189 = vmatprep.subr.mxu0 0.0
  %190 = vmatpush1.msra.mxu0 %v63
  %191 = vmatprep.subr.mxu0 0.0
  %192 = vmatpush1.msra.mxu0 %v62
  %193 = vmatprep.subr.mxu0 0.0
  %194 = vmatpush2.msra.mxu0 0.0
  %195 = vmatprep.subr.mxu0 0.0
  %196 = vmatpush2.msra.mxu0 0.0
  %197 = vmatprep.subr.mxu0 0.0
  %198 = vmatpush2.msra.mxu0 0.0
  %199 = vmatprep.subr.mxu0 0.0
  %200 = vmatpush2.msra.mxu0 0.0
  %201 = vmatprep.subr.mxu0 0.0
  %202 = vmatpush2.msra.mxu0 0.0
  %203 = vmatprep.subr.mxu0 0.0
  %204 = vmatpush2.msra.mxu0 0.0
  %205 = vmatprep.subr.mxu0 0.0
  %206 = vmatpush2.msra.mxu0 0.0
  %207 = vmatprep.subr.mxu0 0.0
  %208 = vmatpush2.msra.mxu0 0.0
  %209 = vmatprep.subr.mxu0 0.0
  %210 = vmatpush2.msra.mxu0 0.0
  %211 = vmatprep.subr.mxu0 0.0
  %212 = vmatpush2.msra.mxu0 0.0
  %213 = vmatprep.subr.mxu0 0.0
  %214 = vmatpush2.msra.mxu0 0.0
  %215 = vmatprep.subr.mxu0 0.0
  %216 = vmatpush2.msra.mxu0 0.0
  %217 = vmatprep.subr.mxu0 0.0
  %218 = vmatpush2.msra.mxu0 0.0
  %219 = vmatprep.subr.mxu0 0.0
  %220 = vmatpush2.msra.mxu0 0.0
  %221 = vmatprep.subr.mxu0 0.0
  %222 = vmatpush2.msra.mxu0 %v79
  %223 = vmatprep.subr.mxu0 0.0
  %224 = vmatpush2.msra.mxu0 %v78
  %225 = vmatprep.mubr.f32.mxu0 %v89
  %226 = vmatmul.mubr.f32.gmra.mxu0 %v28
  %v227 = vpop.f32.mrf.mxu0
  %v228 = vadd.f32 %v158, %v227
  %v229 = vpop.f32.mrf.mxu0
  %230 = vdwg.mxu0
  %v231 = vmax.f32 %v228, 0.0
  %v232 = vld [vmem:[%s3] sm:$0xff]
  %v233 = vld [vmem:[%s3 + $0x8] sm:$0xff]
  %v234 = vld [vmem:[%s3 + $0x10] sm:$0xff]
  %v235 = vld [vmem:[%s3 + $0x18] sm:$0xff]
  %v236 = vld [vmem:[%s3 + $0x20] sm:$0xff]
  %v237 = vld [vmem:[%s3 + $0x28] sm:$0xff]
  %v238 = vld [vmem:[%s3 + $0x30] sm:$0xff]
  %v239 = vld [vmem:[%s3 + $0x38] sm:$0xff]
  %v240 = vld [vmem:[%s3 + $0x40] sm:$0xff]
  %v241 = vld [vmem:[%s3 + $0x48] sm:$0xff]
  %v242 = vld [vmem:[%s3 + $0x50] sm:$0xff]
  %v243 = vld [vmem:[%s3 + $0x58] sm:$0xff]
  %v244 = vld [vmem:[%s3 + $0x60] sm:$0xff]
  %v245 = vld [vmem:[%s3 + $0x68] sm:$0xff]
  %v246 = vld [vmem:[%s3 + $0x70] sm:$0xff]
  %v247 = vld [vmem:[%s4] sm:$0x1]
  %v249 = vlaneseq
  %v250 = vshrl.u32 %v249, 7
  %v251 = vsub.s32 0, %v250
  %v252 = vrot.slane %v247, %v251
  %vm254 = vcmask 982016
  %v256 = vsel %vm254, %v231, 0
  %258 = vmatprep.subr.mxu0 0.0
  %259 = vmatpush1.msra.mxu0 0.0
  %260 = vmatprep.subr.mxu0 0.0
  %261 = vmatpush1.msra.mxu0 %v246
  %262 = vmatprep.subr.mxu0 0.0
  %263 = vmatpush1.msra.mxu0 %v245
  %264 = vmatprep.subr.mxu0 0.0
  %265 = vmatpush1.msra.mxu0 %v244
  %266 = vmatprep.subr.mxu0 0.0
  %267 = vmatpush1.msra.mxu0 %v243
  %268 = vmatprep.subr.mxu0 0.0
  %269 = vmatpush1.msra.mxu0 %v242
  %270 = vmatprep.subr.mxu0 0.0
  %271 = vmatpush1.msra.mxu0 %v241
  %272 = vmatprep.subr.mxu0 0.0
  %273 = vmatpush1.msra.mxu0 %v240
  %274 = vmatprep.subr.mxu0 0.0
  %275 = vmatpush1.msra.mxu0 %v239
  %276 = vmatprep.subr.mxu0 0.0
  %277 = vmatpush1.msra.mxu0 %v238
  %278 = vmatprep.subr.mxu0 0.0
  %279 = vmatpush1.msra.mxu0 %v237
  %280 = vmatprep.subr.mxu0 0.0
  %281 = vmatpush1.msra.mxu0 %v236
  %282 = vmatprep.subr.mxu0 0.0
  %283 = vmatpush1.msra.mxu0 %v235
  %284 = vmatprep.subr.mxu0 0.0
  %285 = vmatpush1.msra.mxu0 %v234
  %286 = vmatprep.subr.mxu0 0.0
  %287 = vmatpush1.msra.mxu0 %v233
  %288 = vmatprep.subr.mxu0 0.0
  %289 = vmatpush1.msra.mxu0 %v232
  %290 = vmatprep.subr.mxu0 0.0
  %291 = vmatpush2.msra.mxu0 0.0
  %292 = vmatprep.subr.mxu0 0.0
  %293 = vmatpush2.msra.mxu0 0.0
  %294 = vmatprep.subr.mxu0 0.0
  %295 = vmatpush2.msra.mxu0 0.0
  %296 = vmatprep.subr.mxu0 0.0
  %297 = vmatpush2.msra.mxu0 0.0
  %298 = vmatprep.subr.mxu0 0.0
  %299 = vmatpush2.msra.mxu0 0.0
  %300 = vmatprep.subr.mxu0 0.0
  %301 = vmatpush2.msra.mxu0 0.0
  %302 = vmatprep.subr.mxu0 0.0
  %303 = vmatpush2.msra.mxu0 0.0
  %304 = vmatprep.subr.mxu0 0.0
  %305 = vmatpush2.msra.mxu0 0.0
  %306 = vmatprep.subr.mxu0 0.0
  %307 = vmatpush2.msra.mxu0 0.0
  %308 = vmatprep.subr.mxu0 0.0
  %309 = vmatpush2.msra.mxu0 0.0
  %310 = vmatprep.subr.mxu0 0.0
  %311 = vmatpush2.msra.mxu0 0.0
  %312 = vmatprep.subr.mxu0 0.0
  %313 = vmatpush2.msra.mxu0 0.0
  %314 = vmatprep.subr.mxu0 0.0
  %315 = vmatpush2.msra.mxu0 0.0
  %316 = vmatprep.subr.mxu0 0.0
  %317 = vmatpush2.msra.mxu0 0.0
  %318 = vmatprep.subr.mxu0 0.0
  %319 = vmatpush2.msra.mxu0 0.0
  %320 = vmatprep.subr.mxu0 0.0
  %321 = vmatpush2.msra.mxu0 0.0
  %322 = vmatprep.mubr.f32.mxu0 0.0
  %323 = vmatmul.mubr.f32.gmra.mxu0 %v256
  %v324 = vpop.f32.mrf.mxu0
  %v325 = vadd.f32 %v252, %v324
  %v326 = vpop.f32.mrf.mxu0
  %327 = vdwg.mxu0
  %v328 = vmax.f32 %v325, 0.0
  %v329 = vld [vmem:[%s5] sm:$0xff]
  %v330 = vld [vmem:[%s5 + $0x8] sm:$0xff]
  %v331 = vld [vmem:[%s5 + $0x10] sm:$0xff]
  %v332 = vld [vmem:[%s5 + $0x18] sm:$0xff]
  %v333 = vld [vmem:[%s5 + $0x20] sm:$0xff]
  %v334 = vld [vmem:[%s5 + $0x28] sm:$0xff]
  %v335 = vld [vmem:[%s5 + $0x30] sm:$0xff]
  %v336 = vld [vmem:[%s5 + $0x38] sm:$0xff]
  %v337 = vld [vmem:[%s5 + $0x40] sm:$0xff]
  %v338 = vld [vmem:[%s5 + $0x48] sm:$0xff]
  %v339 = vld [vmem:[%s5 + $0x50] sm:$0xf]
  %v340 = vld [vmem:[%s6] sm:$0x1]
  %v342 = vlaneseq
  %v343 = vshrl.u32 %v342, 7
  %v344 = vsub.s32 0, %v343
  %v345 = vrot.slane %v340, %v344
  %vm347 = vcmask 687104
  %v349 = vsel %vm347, %v328, 0
  %vm351 = vcmask 1043456
  %v353 = vsel %vm351, %v339, 0
  %355 = vmatprep.subr.mxu0 0.0
  %356 = vmatpush1.msra.mxu0 0.0
  %357 = vmatprep.subr.mxu0 0.0
  %358 = vmatpush1.msra.mxu0 0.0
  %359 = vmatprep.subr.mxu0 0.0
  %360 = vmatpush1.msra.mxu0 0.0
  %361 = vmatprep.subr.mxu0 0.0
  %362 = vmatpush1.msra.mxu0 0.0
  %363 = vmatprep.subr.mxu0 0.0
  %364 = vmatpush1.msra.mxu0 0.0
  %365 = vmatprep.subr.mxu0 0.0
  %366 = vmatpush1.msra.mxu0 %v353
  %367 = vmatprep.subr.mxu0 0.0
  %368 = vmatpush1.msra.mxu0 %v338
  %369 = vmatprep.subr.mxu0 0.0
  %370 = vmatpush1.msra.mxu0 %v337
  %371 = vmatprep.subr.mxu0 0.0
  %372 = vmatpush1.msra.mxu0 %v336
  %373 = vmatprep.subr.mxu0 0.0
  %374 = vmatpush1.msra.mxu0 %v335
  %375 = vmatprep.subr.mxu0 0.0
  %376 = vmatpush1.msra.mxu0 %v334
  %377 = vmatprep.subr.mxu0 0.0
  %378 = vmatpush1.msra.mxu0 %v333
  %379 = vmatprep.subr.mxu0 0.0
  %380 = vmatpush1.msra.mxu0 %v332
  %381 = vmatprep.subr.mxu0 0.0
  %382 = vmatpush1.msra.mxu0 %v331
  %383 = vmatprep.subr.mxu0 0.0
  %384 = vmatpush1.msra.mxu0 %v330
  %385 = vmatprep.subr.mxu0 0.0
  %386 = vmatpush1.msra.mxu0 %v329
  %387 = vmatprep.subr.mxu0 0.0
  %388 = vmatpush2.msra.mxu0 0.0
  %389 = vmatprep.subr.mxu0 0.0
  %390 = vmatpush2.msra.mxu0 0.0
  %391 = vmatprep.subr.mxu0 0.0
  %392 = vmatpush2.msra.mxu0 0.0
  %393 = vmatprep.subr.mxu0 0.0
  %394 = vmatpush2.msra.mxu0 0.0
  %395 = vmatprep.subr.mxu0 0.0
  %396 = vmatpush2.msra.mxu0 0.0
  %397 = vmatprep.subr.mxu0 0.0
  %398 = vmatpush2.msra.mxu0 0.0
  %399 = vmatprep.subr.mxu0 0.0
  %400 = vmatpush2.msra.mxu0 0.0
  %401 = vmatprep.subr.mxu0 0.0
  %402 = vmatpush2.msra.mxu0 0.0
  %403 = vmatprep.subr.mxu0 0.0
  %404 = vmatpush2.msra.mxu0 0.0
  %405 = vmatprep.subr.mxu0 0.0
  %406 = vmatpush2.msra.mxu0 0.0
  %407 = vmatprep.subr.mxu0 0.0
  %408 = vmatpush2.msra.mxu0 0.0
  %409 = vmatprep.subr.mxu0 0.0
  %410 = vmatpush2.msra.mxu0 0.0
  %411 = vmatprep.subr.mxu0 0.0
  %412 = vmatpush2.msra.mxu0 0.0
  %413 = vmatprep.subr.mxu0 0.0
  %414 = vmatpush2.msra.mxu0 0.0
  %415 = vmatprep.subr.mxu0 0.0
  %416 = vmatpush2.msra.mxu0 0.0
  %417 = vmatprep.subr.mxu0 0.0
  %418 = vmatpush2.msra.mxu0 0.0
  %419 = vmatprep.mubr.f32.mxu0 0.0
  %420 = vmatmul.mubr.f32.gmra.mxu0 %v349
  %v421 = vpop.f32.mrf.mxu0
  %v422 = vadd.f32 %v345, %v421
  %v423 = vpop.f32.mrf.mxu0
  %424 = vdwg.mxu0
  %vm425 = vcmask 80896
  %v426 = vsel %vm425, %v422, -inf
  %427 = vmax.xlane.f32.xlu0 %v426
  %v428 = vpop.xlane.xlu0 %427
  %v429 = vsub.f32 %v422, %v428
  %v430 = vmul.f32 %v429, 1.442695
  %v431 = vpow.pop %v430
  %v432 = vsel %vm425, %v431, 0.0
  %433 = vadd.xlane.f32.xlu0 %v432
  %v434 = vpop.xlane.xlu0 %433
  %v435 = vlog2.pop %v434
  %v436 = vmul.f32 %v435, 0.6931472
  %v437 = vadd.f32 %v428, %v436
  %v438 = vsub.f32 %v422, %v437
  %439 = vst.msk [vmem:[%s7] sm:$0xff] %vm425, %v438
  // Predicated region
  $region30: #{forward.5} parent=0 // pred_check
    _
  $region31: #{forward.5} parent=0 // pred_check_branch
    %441 = sbr.rel (0) target = $region33
  $region32: #{forward.5} parent=0 // pred_region
    _
  $region33: #{forward.5} parent=0 // pred_fallthru
    _
  // Predicated region
  $region34: #{forward.5} parent=0 // pred_check
    _
  $region35: #{forward.5} parent=0 // pred_check_branch
    %443 = sbr.rel (0) target = $region37
  $region36: #{forward.5} parent=0 // pred_region
    _
  $region37: #{forward.5} parent=0 // pred_fallthru
    _

</llo_original>
